<compile_context>
chip_gen: v5e
topology: v5e:2x2
jax: 0.10.0
libtpu: 0.0.40
codegen_flags: <defaults>
</compile_context>

<pallas_src>
import numpy as np
import jax
import jax.numpy as jnp
from jax import lax
from jax.experimental import pallas as pl
from jax.experimental.pallas import tpu as pltpu

IMG    = 28                       # input spatial size (implied by fc = 4*4*10)
KSZ    = 28                       # conv kernel size
PADC   = 14                       # conv padding
CIN    = 1
COUT   = 10                       # conv output channels
POOL   = 7                        # max-pool kernel & stride
NPOOL  = 4                        # pooled spatial size: floor(29 / 7)
FEAT   = COUT * NPOOL * NPOOL     # 160 flattened features fed to the fc
NCLS   = 10

PATCH  = IMG + POOL - 1           # 34: patch side per pooling-window offset
KDIM   = PATCH * PATCH            # 1156: contraction dim of the lowered conv
NW     = POOL * POOL              # 49 pooling-window offsets
NW_PAD = 56                       # padded to a multiple of 8 (sublane aligned)


# ----------------------------------------------------------------------------
# x-independent parameter lowering (do once per parameter set, reuse per call)
# ----------------------------------------------------------------------------
def lower_params(conv_w, conv_b, fc_w):
    """Lower (conv_w, conv_b, fc_w) into kernel-ready operands.

    m[t*34+s, c*16+p*4+q] = conv_w[c, 0, t + 8 - 7p, s + 8 - 7q]  (0 if OOB)
    so that for the (wy, wx) pooling-window offset patch
        P[t, s] = x[t - 6 + wy, s - 6 + wx]   (0 if OOB)
    we get  (P.flatten() @ m)[c,p,q] == conv(x)[c, 7p + wy, 7q + wx].
    Feature order (c, p, q) matches torch's x.view(B, -1) after the pool.
    """
    w = np.asarray(conv_w, np.float32).reshape(COUT, KSZ, KSZ)
    t = np.arange(PATCH)
    ky = t[None, :] + (PADC - POOL + 1) - POOL * np.arange(NPOOL)[:, None]  # (4, 34)
    valid = (ky >= 0) & (ky < KSZ)
    kyc = np.clip(ky, 0, KSZ - 1)
    # m5[c, p, q, t, s] = w[c, ky[p, t], ky[q, s]] (masked outside the kernel)
    m5 = w[:, kyc[:, None, :, None], kyc[None, :, None, :]]
    m5 = m5 * (valid[:, None, :, None] & valid[None, :, None, :])
    m = m5.transpose(3, 4, 0, 1, 2).reshape(KDIM, FEAT)                    # (1156, 160)
    bias = np.repeat(np.asarray(conv_b, np.float32), NPOOL * NPOOL).reshape(1, FEAT)
    wfc_t = np.asarray(fc_w, np.float32).T.copy()                          # (160, 10) MXU-native
    return jnp.asarray(m), jnp.asarray(bias), jnp.asarray(wfc_t)


# ----------------------------------------------------------------------------
# per-call layout plumbing (pure data movement, no arithmetic)
# ----------------------------------------------------------------------------
def extract_patches(x):
    """One (34, 34) window of the zero-padded image per pooling-window offset.

    49 real offsets + 7 duplicates of offset (0, 0) -> 56 rows per image so the
    per-image row group is a multiple of 8 sublanes (duplicates do not change
    the max).  Rows are b-major: row index = b * 56 + w.
    """
    b = x.shape[0]
    img = x.reshape(b, IMG, IMG).astype(jnp.float32)
    pad = POOL - 1
    xp = jnp.pad(img, ((0, 0), (pad, pad), (pad, pad)))                    # (B, 40, 40)
    offs = [(wy, wx) for wy in range(POOL) for wx in range(POOL)]
    offs += [offs[0]] * (NW_PAD - NW)
    windows = [xp[:, wy:wy + PATCH, wx:wx + PATCH] for (wy, wx) in offs]
    patches = jnp.stack(windows, axis=1)                                   # (B, 56, 34, 34)
    return patches.reshape(b * NW_PAD, KDIM)                               # (B*56, 1156)


# ----------------------------------------------------------------------------
# fused Pallas kernel: lowered conv + max-pool + bias/ReLU + fc
# ----------------------------------------------------------------------------
def _fused_kernel(patches_ref, m_ref, bias_ref, wfct_ref, out_ref):
    # Lowered convolution: each row is one pooling-window offset of one image.
    r = jnp.dot(patches_ref[...], m_ref[...],
                preferred_element_type=jnp.float32)                        # (B*56, 160)

    # Max-pool == per-image max over the 56 offset rows (ReLU and the constant
    # bias commute with the max, so they are applied once afterwards).
    # NW_PAD is a multiple of 8, so these are tile-aligned static slices
    # followed by sublane reductions (B is small & static -> unrolled).
    nb = patches_ref.shape[0] // NW_PAD
    pooled = jnp.concatenate(
        [jnp.max(r[i * NW_PAD:(i + 1) * NW_PAD, :], axis=0, keepdims=True)
         for i in range(nb)], axis=0)                                      # (B, 160)

    act = jnp.maximum(pooled + bias_ref[...], 0.0)                         # conv bias + ReLU
    out_ref[...] = jnp.dot(act, wfct_ref[...],
                           preferred_element_type=jnp.float32)             # (B, 10)


def boris_conv_net(x, lowered):
    """Pallas implementation of BorisConvNet.forward."""
    m, bias, wfc_t = lowered
    patches = extract_patches(x)
    vmem = pl.BlockSpec(memory_space=pltpu.MemorySpace.VMEM)
    return pl.pallas_call(
        _fused_kernel,
        out_shape=jax.ShapeDtypeStruct((x.shape[0], NCLS), jnp.float32),
        in_specs=[vmem] * 4,
        out_specs=vmem,
    )(patches, m, bias, wfc_t)


# ----------------------------------------------------------------------------
# pure-JAX reference (mirrors the PyTorch forward) for correctness checking
# ----------------------------------------------------------------------------
def reference(x, conv_w, conv_b, fc_w):
    h = lax.conv_general_dilated(
        x.astype(jnp.float32), conv_w, window_strides=(1, 1),
        padding=[(PADC, PADC), (PADC, PADC)],
        dimension_numbers=("NCHW", "OIHW", "NCHW"),
        precision=lax.Precision.HIGHEST)                                   # (B, 10, 29, 29)
    h = jnp.maximum(h + conv_b.reshape(1, COUT, 1, 1), 0.0)
    pooled = lax.reduce_window(h, -jnp.inf, lax.max,
                               (1, 1, POOL, POOL), (1, 1, POOL, POOL),
                               "VALID")                                    # (B, 10, 4, 4)
    flat = pooled.reshape(x.shape[0], -1)                                  # (B, 160)
    return jnp.dot(flat, fc_w.T, precision=lax.Precision.HIGHEST)          # (B, 10)


if __name__ == "__main__":
    key = jax.random.PRNGKey(0)
    kx, kw, kb, kf = jax.random.split(key, 4)
    x = jax.random.normal(kx, (2, CIN, IMG, IMG), jnp.float32)             # NCHW input, batch=2
    conv_w = jax.random.normal(kw, (COUT, CIN, KSZ, KSZ), jnp.float32) * 0.05
    conv_b = jax.random.normal(kb, (COUT,), jnp.float32) * 0.1
    fc_w = jax.random.normal(kf, (NCLS, FEAT), jnp.float32) * 0.1

    lowered = lower_params(conv_w, conv_b, fc_w)      # x-independent: compute once, cache
    forward = jax.jit(boris_conv_net)

    out = jax.block_until_ready(forward(x, lowered))
    ref = jax.block_until_ready(reference(x, conv_w, conv_b, fc_w))

    assert out.shape == (2, NCLS), out.shape
    max_diff = float(jnp.max(jnp.abs(out - ref)))
    assert max_diff < 2e-2, f"kernel/reference mismatch: {max_diff}"
    print("KERNEL_OK")
</pallas_src>

<mosaic_0001>
module attributes {stable_mosaic.version = 11 : i64} {
  func.func @_fused_kernel(%arg0: memref<112x1156xf32, #tpu.memory_space<vmem>>, %arg1: memref<1156x160xf32, #tpu.memory_space<vmem>>, %arg2: memref<1x160xf32, #tpu.memory_space<vmem>>, %arg3: memref<160x10xf32, #tpu.memory_space<vmem>>, %arg4: memref<2x10xf32, #tpu.memory_space<vmem>>) attributes {dimension_semantics = [], scalar_prefetch = 0 : i64, scratch_operands = 0 : i64, tpu.core_type = #tpu.core_type<tc>} {
    %c0 = arith.constant 0 : index
    %c0_0 = arith.constant 0 : index
    %0 = vector.load %arg0[%c0, %c0_0] : memref<112x1156xf32, #tpu.memory_space<vmem>>, vector<112x1156xf32>
    %c0_1 = arith.constant 0 : index
    %c0_2 = arith.constant 0 : index
    %1 = vector.load %arg1[%c0_1, %c0_2] : memref<1156x160xf32, #tpu.memory_space<vmem>>, vector<1156x160xf32>
    %cst = arith.constant dense<0.000000e+00> : vector<112x160xf32>
    %2 = tpu.matmul %0, %1, %cst {dimension_numbers = #tpu.dot_dimension_numbers<[1], [0], [0], [1], [0, 0, 1, 1], [], []>} : vector<112x1156xf32>, vector<1156x160xf32>, vector<112x160xf32> -> vector<112x160xf32>
    %3 = vector.extract_strided_slice %2 {offsets = [0, 0], sizes = [56, 160], strides = [1, 1]} : vector<112x160xf32> to vector<56x160xf32>
    %cst_3 = arith.constant dense<0xFF800000> : vector<160xf32>
    %4 = vector.multi_reduction <maximumf>, %3, %cst_3 [0] : vector<56x160xf32> to vector<160xf32>
    %5 = vector.shape_cast %4 : vector<160xf32> to vector<1x160xf32>
    %6 = vector.extract_strided_slice %2 {offsets = [56, 0], sizes = [56, 160], strides = [1, 1]} : vector<112x160xf32> to vector<56x160xf32>
    %cst_4 = arith.constant dense<0xFF800000> : vector<160xf32>
    %7 = vector.multi_reduction <maximumf>, %6, %cst_4 [0] : vector<56x160xf32> to vector<160xf32>
    %8 = vector.shape_cast %7 : vector<160xf32> to vector<1x160xf32>
    %9 = tpu.concatenate %5, %8 in 0 : vector<1x160xf32>, vector<1x160xf32> -> vector<2x160xf32>
    %c0_5 = arith.constant 0 : index
    %c0_6 = arith.constant 0 : index
    %10 = vector.load %arg2[%c0_5, %c0_6] : memref<1x160xf32, #tpu.memory_space<vmem>>, vector<1x160xf32>
    %11 = vector.broadcast %10 : vector<1x160xf32> to vector<2x160xf32>
    %12 = arith.addf %9, %11 : vector<2x160xf32>
    %cst_7 = arith.constant 0.000000e+00 : f32
    %13 = vector.broadcast %cst_7 : f32 to vector<2x160xf32>
    %14 = arith.maximumf %12, %13 : vector<2x160xf32>
    %c0_8 = arith.constant 0 : index
    %c0_9 = arith.constant 0 : index
    %15 = vector.load %arg3[%c0_8, %c0_9] : memref<160x10xf32, #tpu.memory_space<vmem>>, vector<160x10xf32>
    %cst_10 = arith.constant dense<0.000000e+00> : vector<2x10xf32>
    %16 = tpu.matmul %14, %15, %cst_10 {dimension_numbers = #tpu.dot_dimension_numbers<[1], [0], [0], [1], [0, 0, 1, 1], [], []>} : vector<2x160xf32>, vector<160x10xf32>, vector<2x10xf32> -> vector<2x10xf32>
    %c0_11 = arith.constant 0 : index
    %c0_12 = arith.constant 0 : index
    %17 = vector.load %arg4[%c0_11, %c0_12] : memref<2x10xf32, #tpu.memory_space<vmem>>, vector<2x10xf32>
    tpu.vector_store %arg4[%c0_11, %c0_12], %16 {strides = array<i32>} : memref<2x10xf32, #tpu.memory_space<vmem>>, vector<2x10xf32>,
    return
  }
}

</mosaic_0001>

<llo_original>
// kernel: boris_conv_net.1
$region0: #{boris_conv_net.1}
  #allocation0 [shape = 'u32[]', space=smem, size = 0x4, offset = 0x4, fixed_abs, tag = 'smem constant byte address 0x4 - core index']
  #allocation1 [shape = 'u32[72,128]{1,0:T(1,128)}', space=vmem, size = 0x9000, scoped, tag = 'internal scratch']
  %s0 = inlined_call_operand.vmem [shape: f32[112,1156], index: 0, kind: input, shape index: {}]
  %s1 = inlined_call_operand.vmem [shape: f32[1156,160], index: 1, kind: input, shape index: {}]
  %s2 = inlined_call_operand.vmem [shape: f32[1,160], index: 2, kind: input, shape index: {}]
  %s3 = inlined_call_operand.vmem [shape: f32[160,10], index: 3, kind: input, shape index: {}]
  %s4 = inlined_call_operand.hbm [shape: f32[2,10], index: 4, kind: output, shape index: {}]
  %s5 = sld [smem:[#allocation0]]
  $region26: #{boris_conv_net.1} parent=0
    _
  %s7 = ssub.s32 1, %s5
  %s8 = scalar_select 0, %s7, %s5
  $region1: #{boris_conv_net.1} parent=0
    #allocation2 [shape = 'u8[1024]{0}', space=vmem, size = 0x400, scoped, tag = 'output window, operand 0, single buffered']
    #allocation3 [shape = 's32[1]{0}', space=sflag, size = 0x4, scoped, tag = 'scoped memory for boris_conv_net.1']
    %9 = vsyncpa [#allocation3], 0
    // Predicated region
    $region2: #{boris_conv_net.1} parent=1 // pred_check
      _
    $region3: #{boris_conv_net.1} parent=1 // pred_check_branch
      %11 = sbr.rel (0) target = $region5
    $region4: #{boris_conv_net.1} parent=1 // pred_region
      _
    $region5: #{boris_conv_net.1} parent=1 // pred_fallthru
      _
    // Predicated region
    $region6: #{boris_conv_net.1} parent=1 // pred_check
      _
    $region7: #{boris_conv_net.1} parent=1 // pred_check_branch
      %13 = sbr.rel (0) target = $region9
    $region8: #{boris_conv_net.1} parent=1 // pred_region
      _
    $region9: #{boris_conv_net.1} parent=1 // pred_fallthru
      _
    // Predicated region
    $region10: #{boris_conv_net.1} parent=1 // pred_check
      _
    $region11: #{boris_conv_net.1} parent=1 // pred_check_branch
      %15 = sbr.rel (0) target = $region13
    $region12: #{boris_conv_net.1} parent=1 // pred_region
      _
    $region13: #{boris_conv_net.1} parent=1 // pred_fallthru
      _
    // Predicated region
    $region14: #{boris_conv_net.1} parent=1 // pred_check
      _
    $region15: #{boris_conv_net.1} parent=1 // pred_check_branch
      %17 = sbr.rel (0) target = $region17
    $region16: #{boris_conv_net.1} parent=1 // pred_region
      _
    $region17: #{boris_conv_net.1} parent=1 // pred_fallthru
      _
    %v18 = vld [vmem:[%s0] sm:$0xff]
    %v19 = vld [vmem:[%s0 + $0x8] sm:$0xff]
    %v20 = vld [vmem:[%s0 + $0x10] sm:$0xff]
    %v21 = vld [vmem:[%s0 + $0x18] sm:$0xff]
    %v22 = vld [vmem:[%s0 + $0x20] sm:$0xff]
    %v23 = vld [vmem:[%s0 + $0x28] sm:$0xff]
    %v24 = vld [vmem:[%s0 + $0x30] sm:$0xff]
    %v25 = vld [vmem:[%s0 + $0x38] sm:$0xff]
    %v26 = vld [vmem:[%s0 + $0x40] sm:$0xff]
    %v27 = vld [vmem:[%s0 + $0x48] sm:$0xff]
    %v28 = vld [vmem:[%s0 + $0x50] sm:$0xff]
    %v29 = vld [vmem:[%s0 + $0x58] sm:$0xff]
    %v30 = vld [vmem:[%s0 + $0x60] sm:$0xff]
    %v31 = vld [vmem:[%s0 + $0x68] sm:$0xff]
    %v32 = vld [vmem:[%s0 + $0x70] sm:$0xff]
    %v33 = vld [vmem:[%s0 + $0x78] sm:$0xff]
    %v34 = vld [vmem:[%s0 + $0x80] sm:$0xff]
    %v35 = vld [vmem:[%s0 + $0x88] sm:$0xff]
    %v36 = vld [vmem:[%s0 + $0x90] sm:$0xff]
    %v37 = vld [vmem:[%s0 + $0x98] sm:$0xff]
    %v38 = vld [vmem:[%s0 + $0xa0] sm:$0xff]
    %v39 = vld [vmem:[%s0 + $0xa8] sm:$0xff]
    %v40 = vld [vmem:[%s0 + $0xb0] sm:$0xff]
    %v41 = vld [vmem:[%s0 + $0xb8] sm:$0xff]
    %v42 = vld [vmem:[%s0 + $0xc0] sm:$0xff]
    %v43 = vld [vmem:[%s0 + $0xc8] sm:$0xff]
    %v44 = vld [vmem:[%s0 + $0xd0] sm:$0xff]
    %v45 = vld [vmem:[%s0 + $0xd8] sm:$0xff]
    %v46 = vld [vmem:[%s0 + $0xe0] sm:$0xff]
    %v47 = vld [vmem:[%s0 + $0xe8] sm:$0xff]
    %v48 = vld [vmem:[%s0 + $0xf0] sm:$0xff]
    %v49 = vld [vmem:[%s0 + $0xf8] sm:$0xff]
    %v50 = vld [vmem:[%s0 + $0x100] sm:$0xff]
    %v51 = vld [vmem:[%s0 + $0x108] sm:$0xff]
    %v52 = vld [vmem:[%s0 + $0x110] sm:$0xff]
    %v53 = vld [vmem:[%s0 + $0x118] sm:$0xff]
    %v54 = vld [vmem:[%s0 + $0x120] sm:$0xff]
    %v55 = vld [vmem:[%s0 + $0x128] sm:$0xff]
    %v56 = vld [vmem:[%s0 + $0x130] sm:$0xff]
    %v57 = vld [vmem:[%s0 + $0x138] sm:$0xff]
    %v58 = vld [vmem:[%s0 + $0x140] sm:$0xff]
    %v59 = vld [vmem:[%s0 + $0x148] sm:$0xff]
    %v60 = vld [vmem:[%s0 + $0x150] sm:$0xff]
    %v61 = vld [vmem:[%s0 + $0x158] sm:$0xff]
    %v62 = vld [vmem:[%s0 + $0x160] sm:$0xff]
    %v63 = vld [vmem:[%s0 + $0x168] sm:$0xff]
    %v64 = vld [vmem:[%s0 + $0x170] sm:$0xff]
    %v65 = vld [vmem:[%s0 + $0x178] sm:$0xff]
    %v66 = vld [vmem:[%s0 + $0x180] sm:$0xff]
    %v67 = vld [vmem:[%s0 + $0x188] sm:$0xff]
    %v68 = vld [vmem:[%s0 + $0x190] sm:$0xff]
    %v69 = vld [vmem:[%s0 + $0x198] sm:$0xff]
    %v70 = vld [vmem:[%s0 + $0x1a0] sm:$0xff]
    %v71 = vld [vmem:[%s0 + $0x1a8] sm:$0xff]
    %v72 = vld [vmem:[%s0 + $0x1b0] sm:$0xff]
    %v73 = vld [vmem:[%s0 + $0x1b8] sm:$0xff]
    %v74 = vld [vmem:[%s0 + $0x1c0] sm:$0xff]
    %v75 = vld [vmem:[%s0 + $0x1c8] sm:$0xff]
    %v76 = vld [vmem:[%s0 + $0x1d0] sm:$0xff]
    %v77 = vld [vmem:[%s0 + $0x1d8] sm:$0xff]
    %v78 = vld [vmem:[%s0 + $0x1e0] sm:$0xff]
    %v79 = vld [vmem:[%s0 + $0x1e8] sm:$0xff]
    %v80 = vld [vmem:[%s0 + $0x1f0] sm:$0xff]
    %v81 = vld [vmem:[%s0 + $0x1f8] sm:$0xff]
    %v82 = vld [vmem:[%s0 + $0x200] sm:$0xff]
    %v83 = vld [vmem:[%s0 + $0x208] sm:$0xff]
    %v84 = vld [vmem:[%s0 + $0x210] sm:$0xff]
    %v85 = vld [vmem:[%s0 + $0x218] sm:$0xff]
    %v86 = vld [vmem:[%s0 + $0x220] sm:$0xff]
    %v87 = vld [vmem:[%s0 + $0x228] sm:$0xff]
    %v88 = vld [vmem:[%s0 + $0x230] sm:$0xff]
    %v89 = vld [vmem:[%s0 + $0x238] sm:$0xff]
    %v90 = vld [vmem:[%s0 + $0x240] sm:$0xff]
    %v91 = vld [vmem:[%s0 + $0x248] sm:$0xff]
    %v92 = vld [vmem:[%s0 + $0x250] sm:$0xff]
    %v93 = vld [vmem:[%s0 + $0x258] sm:$0xff]
    %v94 = vld [vmem:[%s0 + $0x260] sm:$0xff]
    %v95 = vld [vmem:[%s0 + $0x268] sm:$0xff]
    %v96 = vld [vmem:[%s0 + $0x270] sm:$0xff]
    %v97 = vld [vmem:[%s0 + $0x278] sm:$0xff]
    %v98 = vld [vmem:[%s0 + $0x280] sm:$0xff]
    %v99 = vld [vmem:[%s0 + $0x288] sm:$0xff]
    %v100 = vld [vmem:[%s0 + $0x290] sm:$0xff]
    %v101 = vld [vmem:[%s0 + $0x298] sm:$0xff]
    %v102 = vld [vmem:[%s0 + $0x2a0] sm:$0xff]
    %v103 = vld [vmem:[%s0 + $0x2a8] sm:$0xff]
    %v104 = vld [vmem:[%s0 + $0x2b0] sm:$0xff]
    %v105 = vld [vmem:[%s0 + $0x2b8] sm:$0xff]
    %v106 = vld [vmem:[%s0 + $0x2c0] sm:$0xff]
    %v107 = vld [vmem:[%s0 + $0x2c8] sm:$0xff]
    %v108 = vld [vmem:[%s0 + $0x2d0] sm:$0xff]
    %v109 = vld [vmem:[%s0 + $0x2d8] sm:$0xff]
    %v110 = vld [vmem:[%s0 + $0x2e0] sm:$0xff]
    %v111 = vld [vmem:[%s0 + $0x2e8] sm:$0xff]
    %v112 = vld [vmem:[%s0 + $0x2f0] sm:$0xff]
    %v113 = vld [vmem:[%s0 + $0x2f8] sm:$0xff]
    %v114 = vld [vmem:[%s0 + $0x300] sm:$0xff]
    %v115 = vld [vmem:[%s0 + $0x308] sm:$0xff]
    %v116 = vld [vmem:[%s0 + $0x310] sm:$0xff]
    %v117 = vld [vmem:[%s0 + $0x318] sm:$0xff]
    %v118 = vld [vmem:[%s0 + $0x320] sm:$0xff]
    %v119 = vld [vmem:[%s0 + $0x328] sm:$0xff]
    %v120 = vld [vmem:[%s0 + $0x330] sm:$0xff]
    %v121 = vld [vmem:[%s0 + $0x338] sm:$0xff]
    %v122 = vld [vmem:[%s0 + $0x340] sm:$0xff]
    %v123 = vld [vmem:[%s0 + $0x348] sm:$0xff]
    %v124 = vld [vmem:[%s0 + $0x350] sm:$0xff]
    %v125 = vld [vmem:[%s0 + $0x358] sm:$0xff]
    %v126 = vld [vmem:[%s0 + $0x360] sm:$0xff]
    %v127 = vld [vmem:[%s0 + $0x368] sm:$0xff]
    %v128 = vld [vmem:[%s0 + $0x370] sm:$0xff]
    %v129 = vld [vmem:[%s0 + $0x378] sm:$0xff]
    %v130 = vld [vmem:[%s0 + $0x380] sm:$0xff]
    %v131 = vld [vmem:[%s0 + $0x388] sm:$0xff]
    %v132 = vld [vmem:[%s0 + $0x390] sm:$0xff]
    %v133 = vld [vmem:[%s0 + $0x398] sm:$0xff]
    %v134 = vld [vmem:[%s0 + $0x3a0] sm:$0xff]
    %v135 = vld [vmem:[%s0 + $0x3a8] sm:$0xff]
    %v136 = vld [vmem:[%s0 + $0x3b0] sm:$0xff]
    %v137 = vld [vmem:[%s0 + $0x3b8] sm:$0xff]
    %v138 = vld [vmem:[%s0 + $0x3c0] sm:$0xff]
    %v139 = vld [vmem:[%s0 + $0x3c8] sm:$0xff]
    %v140 = vld [vmem:[%s0 + $0x3d0] sm:$0xff]
    %v141 = vld [vmem:[%s0 + $0x3d8] sm:$0xff]
    %v142 = vld [vmem:[%s0 + $0x3e0] sm:$0xff]
    %v143 = vld [vmem:[%s0 + $0x3e8] sm:$0xff]
    %v144 = vld [vmem:[%s0 + $0x3f0] sm:$0xff]
    %v145 = vld [vmem:[%s0 + $0x3f8] sm:$0xff]
    %v146 = vld [vmem:[%s0 + $0x400] sm:$0xff]
    %v147 = vld [vmem:[%s0 + $0x408] sm:$0xff]
    %v148 = vld [vmem:[%s0 + $0x410] sm:$0xff]
    %v149 = vld [vmem:[%s0 + $0x418] sm:$0xff]
    %v150 = vld [vmem:[%s0 + $0x420] sm:$0xff]
    %v151 = vld [vmem:[%s0 + $0x428] sm:$0xff]
    %v152 = vld [vmem:[%s0 + $0x430] sm:$0xff]
    %v153 = vld [vmem:[%s0 + $0x438] sm:$0xff]
    %v154 = vld [vmem:[%s0 + $0x440] sm:$0xff]
    %v155 = vld [vmem:[%s0 + $0x448] sm:$0xff]
    %v156 = vld [vmem:[%s0 + $0x450] sm:$0xff]
    %v157 = vld [vmem:[%s0 + $0x458] sm:$0xff]
    %v158 = vld [vmem:[%s1] sm:$0xff]
    %v159 = vld [vmem:[%s1 + $0x8] sm:$0xff]
    %v160 = vld [vmem:[%s1 + $0x10] sm:$0xff]
    %v161 = vld [vmem:[%s1 + $0x18] sm:$0xff]
    %v162 = vld [vmem:[%s1 + $0x20] sm:$0xff]
    %v163 = vld [vmem:[%s1 + $0x28] sm:$0xff]
    %v164 = vld [vmem:[%s1 + $0x30] sm:$0xff]
    %v165 = vld [vmem:[%s1 + $0x38] sm:$0xff]
    %v166 = vld [vmem:[%s1 + $0x40] sm:$0xff]
    %v167 = vld [vmem:[%s1 + $0x48] sm:$0xff]
    %v168 = vld [vmem:[%s1 + $0x50] sm:$0xff]
    %v169 = vld [vmem:[%s1 + $0x58] sm:$0xff]
    %v170 = vld [vmem:[%s1 + $0x60] sm:$0xff]
    %v171 = vld [vmem:[%s1 + $0x68] sm:$0xff]
    %v172 = vld [vmem:[%s1 + $0x70] sm:$0xff]
    %v173 = vld [vmem:[%s1 + $0x78] sm:$0xff]
    %v174 = vld [vmem:[%s1 + $0x80] sm:$0xff]
    %v175 = vld [vmem:[%s1 + $0x88] sm:$0xff]
    %v176 = vld [vmem:[%s1 + $0x90] sm:$0xff]
    %v177 = vld [vmem:[%s1 + $0x98] sm:$0xff]
    %v178 = vld [vmem:[%s1 + $0xa0] sm:$0xff]
    %v179 = vld [vmem:[%s1 + $0xa8] sm:$0xff]
    %v180 = vld [vmem:[%s1 + $0xb0] sm:$0xff]
    %v181 = vld [vmem:[%s1 + $0xb8] sm:$0xff]
    %v182 = vld [vmem:[%s1 + $0xc0] sm:$0xff]
    %v183 = vld [vmem:[%s1 + $0xc8] sm:$0xff]
    %v184 = vld [vmem:[%s1 + $0xd0] sm:$0xff]
    %v185 = vld [vmem:[%s1 + $0xd8] sm:$0xff]
    %v186 = vld [vmem:[%s1 + $0xe0] sm:$0xff]
    %v187 = vld [vmem:[%s1 + $0xe8] sm:$0xff]
    %v188 = vld [vmem:[%s1 + $0xf0] sm:$0xff]
    %v189 = vld [vmem:[%s1 + $0xf8] sm:$0xff]
    %v190 = vld [vmem:[%s1 + $0x100] sm:$0xff]
    %v191 = vld [vmem:[%s1 + $0x108] sm:$0xff]
    %v192 = vld [vmem:[%s1 + $0x110] sm:$0xff]
    %v193 = vld [vmem:[%s1 + $0x118] sm:$0xff]
    %v194 = vld [vmem:[%s1 + $0x120] sm:$0xff]
    %v195 = vld [vmem:[%s1 + $0x128] sm:$0xff]
    %v196 = vld [vmem:[%s1 + $0x130] sm:$0xff]
    %v197 = vld [vmem:[%s1 + $0x138] sm:$0xff]
    %v198 = vld [vmem:[%s1 + $0x140] sm:$0xff]
    %v199 = vld [vmem:[%s1 + $0x148] sm:$0xff]
    %v200 = vld [vmem:[%s1 + $0x150] sm:$0xff]
    %v201 = vld [vmem:[%s1 + $0x158] sm:$0xff]
    %v202 = vld [vmem:[%s1 + $0x160] sm:$0xff]
    %v203 = vld [vmem:[%s1 + $0x168] sm:$0xff]
    %v204 = vld [vmem:[%s1 + $0x170] sm:$0xff]
    %v205 = vld [vmem:[%s1 + $0x178] sm:$0xff]
    %v206 = vld [vmem:[%s1 + $0x180] sm:$0xff]
    %v207 = vld [vmem:[%s1 + $0x188] sm:$0xff]
    %v208 = vld [vmem:[%s1 + $0x190] sm:$0xff]
    %v209 = vld [vmem:[%s1 + $0x198] sm:$0xff]
    %v210 = vld [vmem:[%s1 + $0x1a0] sm:$0xff]
    %v211 = vld [vmem:[%s1 + $0x1a8] sm:$0xff]
    %v212 = vld [vmem:[%s1 + $0x1b0] sm:$0xff]
    %v213 = vld [vmem:[%s1 + $0x1b8] sm:$0xff]
    %v214 = vld [vmem:[%s1 + $0x1c0] sm:$0xff]
    %v215 = vld [vmem:[%s1 + $0x1c8] sm:$0xff]
    %v216 = vld [vmem:[%s1 + $0x1d0] sm:$0xff]
    %v217 = vld [vmem:[%s1 + $0x1d8] sm:$0xff]
    %v218 = vld [vmem:[%s1 + $0x1e0] sm:$0xff]
    %v219 = vld [vmem:[%s1 + $0x1e8] sm:$0xff]
    %v220 = vld [vmem:[%s1 + $0x1f0] sm:$0xff]
    %v221 = vld [vmem:[%s1 + $0x1f8] sm:$0xff]
    %v222 = vld [vmem:[%s1 + $0x200] sm:$0xff]
    %v223 = vld [vmem:[%s1 + $0x208] sm:$0xff]
    %v224 = vld [vmem:[%s1 + $0x210] sm:$0xff]
    %v225 = vld [vmem:[%s1 + $0x218] sm:$0xff]
    %v226 = vld [vmem:[%s1 + $0x220] sm:$0xff]
    %v227 = vld [vmem:[%s1 + $0x228] sm:$0xff]
    %v228 = vld [vmem:[%s1 + $0x230] sm:$0xff]
    %v229 = vld [vmem:[%s1 + $0x238] sm:$0xff]
    %v230 = vld [vmem:[%s1 + $0x240] sm:$0xff]
    %v231 = vld [vmem:[%s1 + $0x248] sm:$0xff]
    %v232 = vld [vmem:[%s1 + $0x250] sm:$0xff]
    %v233 = vld [vmem:[%s1 + $0x258] sm:$0xff]
    %v234 = vld [vmem:[%s1 + $0x260] sm:$0xff]
    %v235 = vld [vmem:[%s1 + $0x268] sm:$0xff]
    %v236 = vld [vmem:[%s1 + $0x270] sm:$0xff]
    %v237 = vld [vmem:[%s1 + $0x278] sm:$0xff]
    %v238 = vld [vmem:[%s1 + $0x280] sm:$0xff]
    %v239 = vld [vmem:[%s1 + $0x288] sm:$0xff]
    %v240 = vld [vmem:[%s1 + $0x290] sm:$0xff]
    %v241 = vld [vmem:[%s1 + $0x298] sm:$0xff]
    %v242 = vld [vmem:[%s1 + $0x2a0] sm:$0xff]
    %v243 = vld [vmem:[%s1 + $0x2a8] sm:$0xff]
    %v244 = vld [vmem:[%s1 + $0x2b0] sm:$0xff]
    %v245 = vld [vmem:[%s1 + $0x2b8] sm:$0xff]
    %v246 = vld [vmem:[%s1 + $0x2c0] sm:$0xff]
    %v247 = vld [vmem:[%s1 + $0x2c8] sm:$0xff]
    %v248 = vld [vmem:[%s1 + $0x2d0] sm:$0xff]
    %v249 = vld [vmem:[%s1 + $0x2d8] sm:$0xff]
    %v250 = vld [vmem:[%s1 + $0x2e0] sm:$0xff]
    %v251 = vld [vmem:[%s1 + $0x2e8] sm:$0xff]
    %v252 = vld [vmem:[%s1 + $0x2f0] sm:$0xff]
    %v253 = vld [vmem:[%s1 + $0x2f8] sm:$0xff]
    %v254 = vld [vmem:[%s1 + $0x300] sm:$0xff]
    %v255 = vld [vmem:[%s1 + $0x308] sm:$0xff]
    %v256 = vld [vmem:[%s1 + $0x310] sm:$0xff]
    %v257 = vld [vmem:[%s1 + $0x318] sm:$0xff]
    %v258 = vld [vmem:[%s1 + $0x320] sm:$0xff]
    %v259 = vld [vmem:[%s1 + $0x328] sm:$0xff]
    %v260 = vld [vmem:[%s1 + $0x330] sm:$0xff]
    %v261 = vld [vmem:[%s1 + $0x338] sm:$0xff]
    %v262 = vld [vmem:[%s1 + $0x340] sm:$0xff]
    %v263 = vld [vmem:[%s1 + $0x348] sm:$0xff]
    %v264 = vld [vmem:[%s1 + $0x350] sm:$0xff]
    %v265 = vld [vmem:[%s1 + $0x358] sm:$0xff]
    %v266 = vld [vmem:[%s1 + $0x360] sm:$0xff]
    %v267 = vld [vmem:[%s1 + $0x368] sm:$0xff]
    %v268 = vld [vmem:[%s1 + $0x370] sm:$0xff]
    %v269 = vld [vmem:[%s1 + $0x378] sm:$0xff]
    %v270 = vld [vmem:[%s1 + $0x380] sm:$0xff]
    %v271 = vld [vmem:[%s1 + $0x388] sm:$0xff]
    %v272 = vld [vmem:[%s1 + $0x390] sm:$0xff]
    %v273 = vld [vmem:[%s1 + $0x398] sm:$0xff]
    %v274 = vld [vmem:[%s1 + $0x3a0] sm:$0xff]
    %v275 = vld [vmem:[%s1 + $0x3a8] sm:$0xff]
    %v276 = vld [vmem:[%s1 + $0x3b0] sm:$0xff]
    %v277 = vld [vmem:[%s1 + $0x3b8] sm:$0xff]
    %v278 = vld [vmem:[%s1 + $0x3c0] sm:$0xff]
    %v279 = vld [vmem:[%s1 + $0x3c8] sm:$0xff]
    %v280 = vld [vmem:[%s1 + $0x3d0] sm:$0xff]
    %v281 = vld [vmem:[%s1 + $0x3d8] sm:$0xff]
    %v282 = vld [vmem:[%s1 + $0x3e0] sm:$0xff]
    %v283 = vld [vmem:[%s1 + $0x3e8] sm:$0xff]
    %v284 = vld [vmem:[%s1 + $0x3f0] sm:$0xff]
    %v285 = vld [vmem:[%s1 + $0x3f8] sm:$0xff]
    %v286 = vld [vmem:[%s1 + $0x400] sm:$0xff]
    %v287 = vld [vmem:[%s1 + $0x408] sm:$0xff]
    %v288 = vld [vmem:[%s1 + $0x410] sm:$0xff]
    %v289 = vld [vmem:[%s1 + $0x418] sm:$0xff]
    %v290 = vld [vmem:[%s1 + $0x420] sm:$0xff]
    %v291 = vld [vmem:[%s1 + $0x428] sm:$0xff]
    %v292 = vld [vmem:[%s1 + $0x430] sm:$0xff]
    %v293 = vld [vmem:[%s1 + $0x438] sm:$0xff]
    %v294 = vld [vmem:[%s1 + $0x440] sm:$0xff]
    %v295 = vld [vmem:[%s1 + $0x448] sm:$0xff]
    %v296 = vld [vmem:[%s1 + $0x450] sm:$0xff]
    %v297 = vld [vmem:[%s1 + $0x458] sm:$0xff]
    %v298 = vld [vmem:[%s1 + $0x460] sm:$0xff]
    %v299 = vld [vmem:[%s1 + $0x468] sm:$0xff]
    %v300 = vld [vmem:[%s1 + $0x470] sm:$0xff]
    %v301 = vld [vmem:[%s1 + $0x478] sm:$0xff]
    %v302 = vld [vmem:[%s1 + $0x480] sm:$0xff]
    %v303 = vld [vmem:[%s1 + $0x488] sm:$0xff]
    %v304 = vld [vmem:[%s1 + $0x490] sm:$0xff]
    %v305 = vld [vmem:[%s1 + $0x498] sm:$0xff]
    %v306 = vld [vmem:[%s1 + $0x4a0] sm:$0xff]
    %v307 = vld [vmem:[%s1 + $0x4a8] sm:$0xff]
    %v308 = vld [vmem:[%s1 + $0x4b0] sm:$0xff]
    %v309 = vld [vmem:[%s1 + $0x4b8] sm:$0xff]
    %v310 = vld [vmem:[%s1 + $0x4c0] sm:$0xff]
    %v311 = vld [vmem:[%s1 + $0x4c8] sm:$0xff]
    %v312 = vld [vmem:[%s1 + $0x4d0] sm:$0xff]
    %v313 = vld [vmem:[%s1 + $0x4d8] sm:$0xff]
    %v314 = vld [vmem:[%s1 + $0x4e0] sm:$0xff]
    %v315 = vld [vmem:[%s1 + $0x4e8] sm:$0xff]
    %v316 = vld [vmem:[%s1 + $0x4f0] sm:$0xff]
    %v317 = vld [vmem:[%s1 + $0x4f8] sm:$0xff]
    %v318 = vld [vmem:[%s1 + $0x500] sm:$0xff]
    %v319 = vld [vmem:[%s1 + $0x508] sm:$0xff]
    %v320 = vld [vmem:[%s1 + $0x510] sm:$0xff]
    %v321 = vld [vmem:[%s1 + $0x518] sm:$0xff]
    %v322 = vld [vmem:[%s1 + $0x520] sm:$0xff]
    %v323 = vld [vmem:[%s1 + $0x528] sm:$0xff]
    %v324 = vld [vmem:[%s1 + $0x530] sm:$0xff]
    %v325 = vld [vmem:[%s1 + $0x538] sm:$0xff]
    %v326 = vld [vmem:[%s1 + $0x540] sm:$0xff]
    %v327 = vld [vmem:[%s1 + $0x548] sm:$0xff]
    %v328 = vld [vmem:[%s1 + $0x550] sm:$0xff]
    %v329 = vld [vmem:[%s1 + $0x558] sm:$0xff]
    %v330 = vld [vmem:[%s1 + $0x560] sm:$0xff]
    %v331 = vld [vmem:[%s1 + $0x568] sm:$0xff]
    %v332 = vld [vmem:[%s1 + $0x570] sm:$0xff]
    %v333 = vld [vmem:[%s1 + $0x578] sm:$0xff]
    %v334 = vld [vmem:[%s1 + $0x580] sm:$0xff]
    %v335 = vld [vmem:[%s1 + $0x588] sm:$0xff]
    %v336 = vld [vmem:[%s1 + $0x590] sm:$0xff]
    %v337 = vld [vmem:[%s1 + $0x598] sm:$0xff]
    %v338 = vld [vmem:[%s1 + $0x5a0] sm:$0xff]
    %v339 = vld [vmem:[%s1 + $0x5a8] sm:$0xff]
    %v340 = vld [vmem:[%s1 + $0x5b0] sm:$0xff]
    %v341 = vld [vmem:[%s1 + $0x5b8] sm:$0xff]
    %v342 = vld [vmem:[%s1 + $0x5c0] sm:$0xff]
    %v343 = vld [vmem:[%s1 + $0x5c8] sm:$0xff]
    %v344 = vld [vmem:[%s1 + $0x5d0] sm:$0xff]
    %v345 = vld [vmem:[%s1 + $0x5d8] sm:$0xff]
    %v346 = vld [vmem:[%s1 + $0x5e0] sm:$0xff]
    %v347 = vld [vmem:[%s1 + $0x5e8] sm:$0xff]
    %v348 = vld [vmem:[%s1 + $0x5f0] sm:$0xff]
    %v349 = vld [vmem:[%s1 + $0x5f8] sm:$0xff]
    %v350 = vld [vmem:[%s1 + $0x600] sm:$0xff]
    %v351 = vld [vmem:[%s1 + $0x608] sm:$0xff]
    %v352 = vld [vmem:[%s1 + $0x610] sm:$0xff]
    %v353 = vld [vmem:[%s1 + $0x618] sm:$0xff]
    %v354 = vld [vmem:[%s1 + $0x620] sm:$0xff]
    %v355 = vld [vmem:[%s1 + $0x628] sm:$0xff]
    %v356 = vld [vmem:[%s1 + $0x630] sm:$0xff]
    %v357 = vld [vmem:[%s1 + $0x638] sm:$0xff]
    %v358 = vld [vmem:[%s1 + $0x640] sm:$0xff]
    %v359 = vld [vmem:[%s1 + $0x648] sm:$0xff]
    %v360 = vld [vmem:[%s1 + $0x650] sm:$0xff]
    %v361 = vld [vmem:[%s1 + $0x658] sm:$0xff]
    %v362 = vld [vmem:[%s1 + $0x660] sm:$0xff]
    %v363 = vld [vmem:[%s1 + $0x668] sm:$0xff]
    %v364 = vld [vmem:[%s1 + $0x670] sm:$0xff]
    %v365 = vld [vmem:[%s1 + $0x678] sm:$0xff]
    %v366 = vld [vmem:[%s1 + $0x680] sm:$0xff]
    %v367 = vld [vmem:[%s1 + $0x688] sm:$0xff]
    %v368 = vld [vmem:[%s1 + $0x690] sm:$0xff]
    %v369 = vld [vmem:[%s1 + $0x698] sm:$0xff]
    %v370 = vld [vmem:[%s1 + $0x6a0] sm:$0xff]
    %v371 = vld [vmem:[%s1 + $0x6a8] sm:$0xff]
    %v372 = vld [vmem:[%s1 + $0x6b0] sm:$0xff]
    %v373 = vld [vmem:[%s1 + $0x6b8] sm:$0xff]
    %v374 = vld [vmem:[%s1 + $0x6c0] sm:$0xff]
    %v375 = vld [vmem:[%s1 + $0x6c8] sm:$0xff]
    %v376 = vld [vmem:[%s1 + $0x6d0] sm:$0xff]
    %v377 = vld [vmem:[%s1 + $0x6d8] sm:$0xff]
    %v378 = vld [vmem:[%s1 + $0x6e0] sm:$0xff]
    %v379 = vld [vmem:[%s1 + $0x6e8] sm:$0xff]
    %v380 = vld [vmem:[%s1 + $0x6f0] sm:$0xff]
    %v381 = vld [vmem:[%s1 + $0x6f8] sm:$0xff]
    %v382 = vld [vmem:[%s1 + $0x700] sm:$0xff]
    %v383 = vld [vmem:[%s1 + $0x708] sm:$0xff]
    %v384 = vld [vmem:[%s1 + $0x710] sm:$0xff]
    %v385 = vld [vmem:[%s1 + $0x718] sm:$0xff]
    %v386 = vld [vmem:[%s1 + $0x720] sm:$0xff]
    %v387 = vld [vmem:[%s1 + $0x728] sm:$0xff]
    %v388 = vld [vmem:[%s1 + $0x730] sm:$0xff]
    %v389 = vld [vmem:[%s1 + $0x738] sm:$0xff]
    %v390 = vld [vmem:[%s1 + $0x740] sm:$0xff]
    %v391 = vld [vmem:[%s1 + $0x748] sm:$0xff]
    %v392 = vld [vmem:[%s1 + $0x750] sm:$0xff]
    %v393 = vld [vmem:[%s1 + $0x758] sm:$0xff]
    %v394 = vld [vmem:[%s1 + $0x760] sm:$0xff]
    %v395 = vld [vmem:[%s1 + $0x768] sm:$0xff]
    %v396 = vld [vmem:[%s1 + $0x770] sm:$0xff]
    %v397 = vld [vmem:[%s1 + $0x778] sm:$0xff]
    %v398 = vld [vmem:[%s1 + $0x780] sm:$0xff]
    %v399 = vld [vmem:[%s1 + $0x788] sm:$0xff]
    %v400 = vld [vmem:[%s1 + $0x790] sm:$0xff]
    %v401 = vld [vmem:[%s1 + $0x798] sm:$0xff]
    %v402 = vld [vmem:[%s1 + $0x7a0] sm:$0xff]
    %v403 = vld [vmem:[%s1 + $0x7a8] sm:$0xff]
    %v404 = vld [vmem:[%s1 + $0x7b0] sm:$0xff]
    %v405 = vld [vmem:[%s1 + $0x7b8] sm:$0xff]
    %v406 = vld [vmem:[%s1 + $0x7c0] sm:$0xff]
    %v407 = vld [vmem:[%s1 + $0x7c8] sm:$0xff]
    %v408 = vld [vmem:[%s1 + $0x7d0] sm:$0xff]
    %v409 = vld [vmem:[%s1 + $0x7d8] sm:$0xff]
    %v410 = vld [vmem:[%s1 + $0x7e0] sm:$0xff]
    %v411 = vld [vmem:[%s1 + $0x7e8] sm:$0xff]
    %v412 = vld [vmem:[%s1 + $0x7f0] sm:$0xff]
    %v413 = vld [vmem:[%s1 + $0x7f8] sm:$0xff]
    %v414 = vld [vmem:[%s1 + $0x800] sm:$0xff]
    %v415 = vld [vmem:[%s1 + $0x808] sm:$0xff]
    %v416 = vld [vmem:[%s1 + $0x810] sm:$0xff]
    %v417 = vld [vmem:[%s1 + $0x818] sm:$0xff]
    %v418 = vld [vmem:[%s1 + $0x820] sm:$0xff]
    %v419 = vld [vmem:[%s1 + $0x828] sm:$0xff]
    %v420 = vld [vmem:[%s1 + $0x830] sm:$0xff]
    %v421 = vld [vmem:[%s1 + $0x838] sm:$0xff]
    %v422 = vld [vmem:[%s1 + $0x840] sm:$0xff]
    %v423 = vld [vmem:[%s1 + $0x848] sm:$0xff]
    %v424 = vld [vmem:[%s1 + $0x850] sm:$0xff]
    %v425 = vld [vmem:[%s1 + $0x858] sm:$0xff]
    %v426 = vld [vmem:[%s1 + $0x860] sm:$0xff]
    %v427 = vld [vmem:[%s1 + $0x868] sm:$0xff]
    %v428 = vld [vmem:[%s1 + $0x870] sm:$0xff]
    %v429 = vld [vmem:[%s1 + $0x878] sm:$0xff]
    %v430 = vld [vmem:[%s1 + $0x880] sm:$0xff]
    %v431 = vld [vmem:[%s1 + $0x888] sm:$0xff]
    %v432 = vld [vmem:[%s1 + $0x890] sm:$0xff]
    %v433 = vld [vmem:[%s1 + $0x898] sm:$0xff]
    %v434 = vld [vmem:[%s1 + $0x8a0] sm:$0xff]
    %v435 = vld [vmem:[%s1 + $0x8a8] sm:$0xff]
    %v436 = vld [vmem:[%s1 + $0x8b0] sm:$0xff]
    %v437 = vld [vmem:[%s1 + $0x8b8] sm:$0xff]
    %v438 = vld [vmem:[%s1 + $0x8c0] sm:$0xff]
    %v439 = vld [vmem:[%s1 + $0x8c8] sm:$0xff]
    %v440 = vld [vmem:[%s1 + $0x8d0] sm:$0xff]
    %v441 = vld [vmem:[%s1 + $0x8d8] sm:$0xff]
    %v442 = vld [vmem:[%s1 + $0x8e0] sm:$0xff]
    %v443 = vld [vmem:[%s1 + $0x8e8] sm:$0xff]
    %v444 = vld [vmem:[%s1 + $0x8f0] sm:$0xff]
    %v445 = vld [vmem:[%s1 + $0x8f8] sm:$0xff]
    %v446 = vld [vmem:[%s1 + $0x900] sm:$0xf]
    %v447 = vld [vmem:[%s1 + $0x908] sm:$0xf]
    %vm448 = vcmask 31744
    %v450 = vsel %vm448, %v27, 0
    %v453 = vsel %vm448, %v37, 0
    %v456 = vsel %vm448, %v47, 0
    %v459 = vsel %vm448, %v57, 0
    %v462 = vsel %vm448, %v67, 0
    %v465 = vsel %vm448, %v77, 0
    %v468 = vsel %vm448, %v87, 0
    %v471 = vsel %vm448, %v97, 0
    %v474 = vsel %vm448, %v107, 0
    %v477 = vsel %vm448, %v117, 0
    %v480 = vsel %vm448, %v127, 0
    %v483 = vsel %vm448, %v137, 0
    %v486 = vsel %vm448, %v147, 0
    %v489 = vsel %vm448, %v157, 0
    %vm491 = vcmask 1043456
    %v493 = vsel %vm491, %v446, 0
    %v496 = vsel %vm491, %v447, 0
    %498 = vmatpush.msra.mxu0 %v188
    %499 = vmatpush.msra.mxu0 %v186
    %500 = vmatpush.msra.mxu0 %v184
    %501 = vmatpush.msra.mxu0 %v182
    %502 = vmatpush.msra.mxu0 %v180
    %503 = vmatpush.msra.mxu0 %v178
    %504 = vmatpush.msra.mxu0 %v176
    %505 = vmatpush.msra.mxu0 %v174
    %506 = vmatpush.msra.mxu0 %v172
    %507 = vmatpush.msra.mxu0 %v170
    %508 = vmatpush.msra.mxu0 %v168
    %509 = vmatpush.msra.mxu0 %v166
    %510 = vmatpush.msra.mxu0 %v164
    %511 = vmatpush.msra.mxu0 %v162
    %512 = vmatpush.msra.mxu0 %v160
    %513 = vmatpush.msra.mxu0 %v158
    %514 = vmatmul.f32.gmra.mxu0 %v18
    %v515 = vpop.f32.mrf.mxu0
    %v516 = vadd.f32 0.0, %v515
    %517 = vmatmul.f32.gmra.mxu0 %v28
    %v518 = vpop.f32.mrf.mxu0
    %v519 = vadd.f32 0.0, %v518
    %520 = vmatmul.f32.gmra.mxu0 %v38
    %v521 = vpop.f32.mrf.mxu0
    %v522 = vadd.f32 0.0, %v521
    %523 = vmatmul.f32.gmra.mxu0 %v48
    %v524 = vpop.f32.mrf.mxu0
    %v525 = vadd.f32 0.0, %v524
    %526 = vmatmul.f32.gmra.mxu0 %v58
    %v527 = vpop.f32.mrf.mxu0
    %v528 = vadd.f32 0.0, %v527
    %529 = vmatmul.f32.gmra.mxu0 %v68
    %v530 = vpop.f32.mrf.mxu0
    %v531 = vadd.f32 0.0, %v530
    %532 = vmatmul.f32.gmra.mxu0 %v78
    %v533 = vpop.f32.mrf.mxu0
    %v534 = vadd.f32 0.0, %v533
    %535 = vmatmul.f32.gmra.mxu0 %v88
    %v536 = vpop.f32.mrf.mxu0
    %v537 = vadd.f32 0.0, %v536
    %538 = vmatmul.f32.gmra.mxu0 %v98
    %v539 = vpop.f32.mrf.mxu0
    %v540 = vadd.f32 0.0, %v539
    %541 = vmatmul.f32.gmra.mxu0 %v108
    %v542 = vpop.f32.mrf.mxu0
    %v543 = vadd.f32 0.0, %v542
    %544 = vmatmul.f32.gmra.mxu0 %v118
    %v545 = vpop.f32.mrf.mxu0
    %v546 = vadd.f32 0.0, %v545
    %547 = vmatmul.f32.gmra.mxu0 %v128
    %v548 = vpop.f32.mrf.mxu0
    %v549 = vadd.f32 0.0, %v548
    %550 = vmatmul.f32.gmra.mxu0 %v138
    %v551 = vpop.f32.mrf.mxu0
    %v552 = vadd.f32 0.0, %v551
    %553 = vmatmul.f32.gmra.mxu0 %v148
    %v554 = vpop.f32.mrf.mxu0
    %v555 = vadd.f32 0.0, %v554
    %556 = vdwg.mxu0
    %557 = vmatpush.msra.mxu0 %v220
    %558 = vmatpush.msra.mxu0 %v218
    %559 = vmatpush.msra.mxu0 %v216
    %560 = vmatpush.msra.mxu0 %v214
    %561 = vmatpush.msra.mxu0 %v212
    %562 = vmatpush.msra.mxu0 %v210
    %563 = vmatpush.msra.mxu0 %v208
    %564 = vmatpush.msra.mxu0 %v206
    %565 = vmatpush.msra.mxu0 %v204
    %566 = vmatpush.msra.mxu0 %v202
    %567 = vmatpush.msra.mxu0 %v200
    %568 = vmatpush.msra.mxu0 %v198
    %569 = vmatpush.msra.mxu0 %v196
    %570 = vmatpush.msra.mxu0 %v194
    %571 = vmatpush.msra.mxu0 %v192
    %572 = vmatpush.msra.mxu0 %v190
    %573 = vmatmul.f32.gmra.mxu0 %v19
    %v574 = vpop.f32.mrf.mxu0
    %v575 = vadd.f32 %v516, %v574
    %576 = vmatmul.f32.gmra.mxu0 %v29
    %v577 = vpop.f32.mrf.mxu0
    %v578 = vadd.f32 %v519, %v577
    %579 = vmatmul.f32.gmra.mxu0 %v39
    %v580 = vpop.f32.mrf.mxu0
    %v581 = vadd.f32 %v522, %v580
    %582 = vmatmul.f32.gmra.mxu0 %v49
    %v583 = vpop.f32.mrf.mxu0
    %v584 = vadd.f32 %v525, %v583
    %585 = vmatmul.f32.gmra.mxu0 %v59
    %v586 = vpop.f32.mrf.mxu0
    %v587 = vadd.f32 %v528, %v586
    %588 = vmatmul.f32.gmra.mxu0 %v69
    %v589 = vpop.f32.mrf.mxu0
    %v590 = vadd.f32 %v531, %v589
    %591 = vmatmul.f32.gmra.mxu0 %v79
    %v592 = vpop.f32.mrf.mxu0
    %v593 = vadd.f32 %v534, %v592
    %594 = vmatmul.f32.gmra.mxu0 %v89
    %v595 = vpop.f32.mrf.mxu0
    %v596 = vadd.f32 %v537, %v595
    %597 = vmatmul.f32.gmra.mxu0 %v99
    %v598 = vpop.f32.mrf.mxu0
    %v599 = vadd.f32 %v540, %v598
    %600 = vmatmul.f32.gmra.mxu0 %v109
    %v601 = vpop.f32.mrf.mxu0
    %v602 = vadd.f32 %v543, %v601
    %603 = vmatmul.f32.gmra.mxu0 %v119
    %v604 = vpop.f32.mrf.mxu0
    %v605 = vadd.f32 %v546, %v604
    %606 = vmatmul.f32.gmra.mxu0 %v129
    %v607 = vpop.f32.mrf.mxu0
    %v608 = vadd.f32 %v549, %v607
    %609 = vmatmul.f32.gmra.mxu0 %v139
    %v610 = vpop.f32.mrf.mxu0
    %v611 = vadd.f32 %v552, %v610
    %612 = vmatmul.f32.gmra.mxu0 %v149
    %v613 = vpop.f32.mrf.mxu0
    %v614 = vadd.f32 %v555, %v613
    %615 = vdwg.mxu0
    %616 = vmatpush.msra.mxu0 %v252
    %617 = vmatpush.msra.mxu0 %v250
    %618 = vmatpush.msra.mxu0 %v248
    %619 = vmatpush.msra.mxu0 %v246
    %620 = vmatpush.msra.mxu0 %v244
    %621 = vmatpush.msra.mxu0 %v242
    %622 = vmatpush.msra.mxu0 %v240
    %623 = vmatpush.msra.mxu0 %v238
    %624 = vmatpush.msra.mxu0 %v236
    %625 = vmatpush.msra.mxu0 %v234
    %626 = vmatpush.msra.mxu0 %v232
    %627 = vmatpush.msra.mxu0 %v230
    %628 = vmatpush.msra.mxu0 %v228
    %629 = vmatpush.msra.mxu0 %v226
    %630 = vmatpush.msra.mxu0 %v224
    %631 = vmatpush.msra.mxu0 %v222
    %632 = vmatmul.f32.gmra.mxu0 %v20
    %v633 = vpop.f32.mrf.mxu0
    %v634 = vadd.f32 %v575, %v633
    %635 = vmatmul.f32.gmra.mxu0 %v30
    %v636 = vpop.f32.mrf.mxu0
    %v637 = vadd.f32 %v578, %v636
    %638 = vmatmul.f32.gmra.mxu0 %v40
    %v639 = vpop.f32.mrf.mxu0
    %v640 = vadd.f32 %v581, %v639
    %641 = vmatmul.f32.gmra.mxu0 %v50
    %v642 = vpop.f32.mrf.mxu0
    %v643 = vadd.f32 %v584, %v642
    %644 = vmatmul.f32.gmra.mxu0 %v60
    %v645 = vpop.f32.mrf.mxu0
    %v646 = vadd.f32 %v587, %v645
    %647 = vmatmul.f32.gmra.mxu0 %v70
    %v648 = vpop.f32.mrf.mxu0
    %v649 = vadd.f32 %v590, %v648
    %650 = vmatmul.f32.gmra.mxu0 %v80
    %v651 = vpop.f32.mrf.mxu0
    %v652 = vadd.f32 %v593, %v651
    %653 = vmatmul.f32.gmra.mxu0 %v90
    %v654 = vpop.f32.mrf.mxu0
    %v655 = vadd.f32 %v596, %v654
    %656 = vmatmul.f32.gmra.mxu0 %v100
    %v657 = vpop.f32.mrf.mxu0
    %v658 = vadd.f32 %v599, %v657
    %659 = vmatmul.f32.gmra.mxu0 %v110
    %v660 = vpop.f32.mrf.mxu0
    %v661 = vadd.f32 %v602, %v660
    %662 = vmatmul.f32.gmra.mxu0 %v120
    %v663 = vpop.f32.mrf.mxu0
    %v664 = vadd.f32 %v605, %v663
    %665 = vmatmul.f32.gmra.mxu0 %v130
    %v666 = vpop.f32.mrf.mxu0
    %v667 = vadd.f32 %v608, %v666
    %668 = vmatmul.f32.gmra.mxu0 %v140
    %v669 = vpop.f32.mrf.mxu0
    %v670 = vadd.f32 %v611, %v669
    %671 = vmatmul.f32.gmra.mxu0 %v150
    %v672 = vpop.f32.mrf.mxu0
    %v673 = vadd.f32 %v614, %v672
    %674 = vdwg.mxu0
    %675 = vmatpush.msra.mxu0 %v284
    %676 = vmatpush.msra.mxu0 %v282
    %677 = vmatpush.msra.mxu0 %v280
    %678 = vmatpush.msra.mxu0 %v278
    %679 = vmatpush.msra.mxu0 %v276
    %680 = vmatpush.msra.mxu0 %v274
    %681 = vmatpush.msra.mxu0 %v272
    %682 = vmatpush.msra.mxu0 %v270
    %683 = vmatpush.msra.mxu0 %v268
    %684 = vmatpush.msra.mxu0 %v266
    %685 = vmatpush.msra.mxu0 %v264
    %686 = vmatpush.msra.mxu0 %v262
    %687 = vmatpush.msra.mxu0 %v260
    %688 = vmatpush.msra.mxu0 %v258
    %689 = vmatpush.msra.mxu0 %v256
    %690 = vmatpush.msra.mxu0 %v254
    %691 = vmatmul.f32.gmra.mxu0 %v21
    %v692 = vpop.f32.mrf.mxu0
    %v693 = vadd.f32 %v634, %v692
    %694 = vmatmul.f32.gmra.mxu0 %v31
    %v695 = vpop.f32.mrf.mxu0
    %v696 = vadd.f32 %v637, %v695
    %697 = vmatmul.f32.gmra.mxu0 %v41
    %v698 = vpop.f32.mrf.mxu0
    %v699 = vadd.f32 %v640, %v698
    %700 = vmatmul.f32.gmra.mxu0 %v51
    %v701 = vpop.f32.mrf.mxu0
    %v702 = vadd.f32 %v643, %v701
    %703 = vmatmul.f32.gmra.mxu0 %v61
    %v704 = vpop.f32.mrf.mxu0
    %v705 = vadd.f32 %v646, %v704
    %706 = vmatmul.f32.gmra.mxu0 %v71
    %v707 = vpop.f32.mrf.mxu0
    %v708 = vadd.f32 %v649, %v707
    %709 = vmatmul.f32.gmra.mxu0 %v81
    %v710 = vpop.f32.mrf.mxu0
    %v711 = vadd.f32 %v652, %v710
    %712 = vmatmul.f32.gmra.mxu0 %v91
    %v713 = vpop.f32.mrf.mxu0
    %v714 = vadd.f32 %v655, %v713
    %715 = vmatmul.f32.gmra.mxu0 %v101
    %v716 = vpop.f32.mrf.mxu0
    %v717 = vadd.f32 %v658, %v716
    %718 = vmatmul.f32.gmra.mxu0 %v111
    %v719 = vpop.f32.mrf.mxu0
    %v720 = vadd.f32 %v661, %v719
    %721 = vmatmul.f32.gmra.mxu0 %v121
    %v722 = vpop.f32.mrf.mxu0
    %v723 = vadd.f32 %v664, %v722
    %724 = vmatmul.f32.gmra.mxu0 %v131
    %v725 = vpop.f32.mrf.mxu0
    %v726 = vadd.f32 %v667, %v725
    %727 = vmatmul.f32.gmra.mxu0 %v141
    %v728 = vpop.f32.mrf.mxu0
    %v729 = vadd.f32 %v670, %v728
    %730 = vmatmul.f32.gmra.mxu0 %v151
    %v731 = vpop.f32.mrf.mxu0
    %v732 = vadd.f32 %v673, %v731
    %733 = vdwg.mxu0
    %734 = vmatpush.msra.mxu0 %v316
    %735 = vmatpush.msra.mxu0 %v314
    %736 = vmatpush.msra.mxu0 %v312
    %737 = vmatpush.msra.mxu0 %v310
    %738 = vmatpush.msra.mxu0 %v308
    %739 = vmatpush.msra.mxu0 %v306
    %740 = vmatpush.msra.mxu0 %v304
    %741 = vmatpush.msra.mxu0 %v302
    %742 = vmatpush.msra.mxu0 %v300
    %743 = vmatpush.msra.mxu0 %v298
    %744 = vmatpush.msra.mxu0 %v296
    %745 = vmatpush.msra.mxu0 %v294
    %746 = vmatpush.msra.mxu0 %v292
    %747 = vmatpush.msra.mxu0 %v290
    %748 = vmatpush.msra.mxu0 %v288
    %749 = vmatpush.msra.mxu0 %v286
    %750 = vmatmul.f32.gmra.mxu0 %v22
    %v751 = vpop.f32.mrf.mxu0
    %v752 = vadd.f32 %v693, %v751
    %753 = vmatmul.f32.gmra.mxu0 %v32
    %v754 = vpop.f32.mrf.mxu0
    %v755 = vadd.f32 %v696, %v754
    %756 = vmatmul.f32.gmra.mxu0 %v42
    %v757 = vpop.f32.mrf.mxu0
    %v758 = vadd.f32 %v699, %v757
    %759 = vmatmul.f32.gmra.mxu0 %v52
    %v760 = vpop.f32.mrf.mxu0
    %v761 = vadd.f32 %v702, %v760
    %762 = vmatmul.f32.gmra.mxu0 %v62
    %v763 = vpop.f32.mrf.mxu0
    %v764 = vadd.f32 %v705, %v763
    %765 = vmatmul.f32.gmra.mxu0 %v72
    %v766 = vpop.f32.mrf.mxu0
    %v767 = vadd.f32 %v708, %v766
    %768 = vmatmul.f32.gmra.mxu0 %v82
    %v769 = vpop.f32.mrf.mxu0
    %v770 = vadd.f32 %v711, %v769
    %771 = vmatmul.f32.gmra.mxu0 %v92
    %v772 = vpop.f32.mrf.mxu0
    %v773 = vadd.f32 %v714, %v772
    %774 = vmatmul.f32.gmra.mxu0 %v102
    %v775 = vpop.f32.mrf.mxu0
    %v776 = vadd.f32 %v717, %v775
    %777 = vmatmul.f32.gmra.mxu0 %v112
    %v778 = vpop.f32.mrf.mxu0
    %v779 = vadd.f32 %v720, %v778
    %780 = vmatmul.f32.gmra.mxu0 %v122
    %v781 = vpop.f32.mrf.mxu0
    %v782 = vadd.f32 %v723, %v781
    %783 = vmatmul.f32.gmra.mxu0 %v132
    %v784 = vpop.f32.mrf.mxu0
    %v785 = vadd.f32 %v726, %v784
    %786 = vmatmul.f32.gmra.mxu0 %v142
    %v787 = vpop.f32.mrf.mxu0
    %v788 = vadd.f32 %v729, %v787
    %789 = vmatmul.f32.gmra.mxu0 %v152
    %v790 = vpop.f32.mrf.mxu0
    %v791 = vadd.f32 %v732, %v790
    %792 = vdwg.mxu0
    %793 = vmatpush.msra.mxu0 %v348
    %794 = vmatpush.msra.mxu0 %v346
    %795 = vmatpush.msra.mxu0 %v344
    %796 = vmatpush.msra.mxu0 %v342
    %797 = vmatpush.msra.mxu0 %v340
    %798 = vmatpush.msra.mxu0 %v338
    %799 = vmatpush.msra.mxu0 %v336
    %800 = vmatpush.msra.mxu0 %v334
    %801 = vmatpush.msra.mxu0 %v332
    %802 = vmatpush.msra.mxu0 %v330
    %803 = vmatpush.msra.mxu0 %v328
    %804 = vmatpush.msra.mxu0 %v326
    %805 = vmatpush.msra.mxu0 %v324
    %806 = vmatpush.msra.mxu0 %v322
    %807 = vmatpush.msra.mxu0 %v320
    %808 = vmatpush.msra.mxu0 %v318
    %809 = vmatmul.f32.gmra.mxu0 %v23
    %v810 = vpop.f32.mrf.mxu0
    %v811 = vadd.f32 %v752, %v810
    %812 = vmatmul.f32.gmra.mxu0 %v33
    %v813 = vpop.f32.mrf.mxu0
    %v814 = vadd.f32 %v755, %v813
    %815 = vmatmul.f32.gmra.mxu0 %v43
    %v816 = vpop.f32.mrf.mxu0
    %v817 = vadd.f32 %v758, %v816
    %818 = vmatmul.f32.gmra.mxu0 %v53
    %v819 = vpop.f32.mrf.mxu0
    %v820 = vadd.f32 %v761, %v819
    %821 = vmatmul.f32.gmra.mxu0 %v63
    %v822 = vpop.f32.mrf.mxu0
    %v823 = vadd.f32 %v764, %v822
    %824 = vmatmul.f32.gmra.mxu0 %v73
    %v825 = vpop.f32.mrf.mxu0
    %v826 = vadd.f32 %v767, %v825
    %827 = vmatmul.f32.gmra.mxu0 %v83
    %v828 = vpop.f32.mrf.mxu0
    %v829 = vadd.f32 %v770, %v828
    %830 = vmatmul.f32.gmra.mxu0 %v93
    %v831 = vpop.f32.mrf.mxu0
    %v832 = vadd.f32 %v773, %v831
    %833 = vmatmul.f32.gmra.mxu0 %v103
    %v834 = vpop.f32.mrf.mxu0
    %v835 = vadd.f32 %v776, %v834
    %836 = vmatmul.f32.gmra.mxu0 %v113
    %v837 = vpop.f32.mrf.mxu0
    %v838 = vadd.f32 %v779, %v837
    %839 = vmatmul.f32.gmra.mxu0 %v123
    %v840 = vpop.f32.mrf.mxu0
    %v841 = vadd.f32 %v782, %v840
    %842 = vmatmul.f32.gmra.mxu0 %v133
    %v843 = vpop.f32.mrf.mxu0
    %v844 = vadd.f32 %v785, %v843
    %845 = vmatmul.f32.gmra.mxu0 %v143
    %v846 = vpop.f32.mrf.mxu0
    %v847 = vadd.f32 %v788, %v846
    %848 = vmatmul.f32.gmra.mxu0 %v153
    %v849 = vpop.f32.mrf.mxu0
    %v850 = vadd.f32 %v791, %v849
    %851 = vdwg.mxu0
    %852 = vmatpush.msra.mxu0 %v380
    %853 = vmatpush.msra.mxu0 %v378
    %854 = vmatpush.msra.mxu0 %v376
    %855 = vmatpush.msra.mxu0 %v374
    %856 = vmatpush.msra.mxu0 %v372
    %857 = vmatpush.msra.mxu0 %v370
    %858 = vmatpush.msra.mxu0 %v368
    %859 = vmatpush.msra.mxu0 %v366
    %860 = vmatpush.msra.mxu0 %v364
    %861 = vmatpush.msra.mxu0 %v362
    %862 = vmatpush.msra.mxu0 %v360
    %863 = vmatpush.msra.mxu0 %v358
    %864 = vmatpush.msra.mxu0 %v356
    %865 = vmatpush.msra.mxu0 %v354
    %866 = vmatpush.msra.mxu0 %v352
    %867 = vmatpush.msra.mxu0 %v350
    %868 = vmatmul.f32.gmra.mxu0 %v24
    %v869 = vpop.f32.mrf.mxu0
    %v870 = vadd.f32 %v811, %v869
    %871 = vmatmul.f32.gmra.mxu0 %v34
    %v872 = vpop.f32.mrf.mxu0
    %v873 = vadd.f32 %v814, %v872
    %874 = vmatmul.f32.gmra.mxu0 %v44
    %v875 = vpop.f32.mrf.mxu0
    %v876 = vadd.f32 %v817, %v875
    %877 = vmatmul.f32.gmra.mxu0 %v54
    %v878 = vpop.f32.mrf.mxu0
    %v879 = vadd.f32 %v820, %v878
    %880 = vmatmul.f32.gmra.mxu0 %v64
    %v881 = vpop.f32.mrf.mxu0
    %v882 = vadd.f32 %v823, %v881
    %883 = vmatmul.f32.gmra.mxu0 %v74
    %v884 = vpop.f32.mrf.mxu0
    %v885 = vadd.f32 %v826, %v884
    %886 = vmatmul.f32.gmra.mxu0 %v84
    %v887 = vpop.f32.mrf.mxu0
    %v888 = vadd.f32 %v829, %v887
    %889 = vmatmul.f32.gmra.mxu0 %v94
    %v890 = vpop.f32.mrf.mxu0
    %v891 = vadd.f32 %v832, %v890
    %892 = vmatmul.f32.gmra.mxu0 %v104
    %v893 = vpop.f32.mrf.mxu0
    %v894 = vadd.f32 %v835, %v893
    %895 = vmatmul.f32.gmra.mxu0 %v114
    %v896 = vpop.f32.mrf.mxu0
    %v897 = vadd.f32 %v838, %v896
    %898 = vmatmul.f32.gmra.mxu0 %v124
    %v899 = vpop.f32.mrf.mxu0
    %v900 = vadd.f32 %v841, %v899
    %901 = vmatmul.f32.gmra.mxu0 %v134
    %v902 = vpop.f32.mrf.mxu0
    %v903 = vadd.f32 %v844, %v902
    %904 = vmatmul.f32.gmra.mxu0 %v144
    %v905 = vpop.f32.mrf.mxu0
    %v906 = vadd.f32 %v847, %v905
    %907 = vmatmul.f32.gmra.mxu0 %v154
    %v908 = vpop.f32.mrf.mxu0
    %v909 = vadd.f32 %v850, %v908
    %910 = vdwg.mxu0
    %911 = vmatpush.msra.mxu0 %v412
    %912 = vmatpush.msra.mxu0 %v410
    %913 = vmatpush.msra.mxu0 %v408
    %914 = vmatpush.msra.mxu0 %v406
    %915 = vmatpush.msra.mxu0 %v404
    %916 = vmatpush.msra.mxu0 %v402
    %917 = vmatpush.msra.mxu0 %v400
    %918 = vmatpush.msra.mxu0 %v398
    %919 = vmatpush.msra.mxu0 %v396
    %920 = vmatpush.msra.mxu0 %v394
    %921 = vmatpush.msra.mxu0 %v392
    %922 = vmatpush.msra.mxu0 %v390
    %923 = vmatpush.msra.mxu0 %v388
    %924 = vmatpush.msra.mxu0 %v386
    %925 = vmatpush.msra.mxu0 %v384
    %926 = vmatpush.msra.mxu0 %v382
    %927 = vmatmul.f32.gmra.mxu0 %v25
    %v928 = vpop.f32.mrf.mxu0
    %v929 = vadd.f32 %v870, %v928
    %930 = vmatmul.f32.gmra.mxu0 %v35
    %v931 = vpop.f32.mrf.mxu0
    %v932 = vadd.f32 %v873, %v931
    %933 = vmatmul.f32.gmra.mxu0 %v45
    %v934 = vpop.f32.mrf.mxu0
    %v935 = vadd.f32 %v876, %v934
    %936 = vmatmul.f32.gmra.mxu0 %v55
    %v937 = vpop.f32.mrf.mxu0
    %v938 = vadd.f32 %v879, %v937
    %939 = vmatmul.f32.gmra.mxu0 %v65
    %v940 = vpop.f32.mrf.mxu0
    %v941 = vadd.f32 %v882, %v940
    %942 = vmatmul.f32.gmra.mxu0 %v75
    %v943 = vpop.f32.mrf.mxu0
    %v944 = vadd.f32 %v885, %v943
    %945 = vmatmul.f32.gmra.mxu0 %v85
    %v946 = vpop.f32.mrf.mxu0
    %v947 = vadd.f32 %v888, %v946
    %948 = vmatmul.f32.gmra.mxu0 %v95
    %v949 = vpop.f32.mrf.mxu0
    %v950 = vadd.f32 %v891, %v949
    %951 = vmatmul.f32.gmra.mxu0 %v105
    %v952 = vpop.f32.mrf.mxu0
    %v953 = vadd.f32 %v894, %v952
    %954 = vmatmul.f32.gmra.mxu0 %v115
    %v955 = vpop.f32.mrf.mxu0
    %v956 = vadd.f32 %v897, %v955
    %957 = vmatmul.f32.gmra.mxu0 %v125
    %v958 = vpop.f32.mrf.mxu0
    %v959 = vadd.f32 %v900, %v958
    %960 = vmatmul.f32.gmra.mxu0 %v135
    %v961 = vpop.f32.mrf.mxu0
    %v962 = vadd.f32 %v903, %v961
    %963 = vmatmul.f32.gmra.mxu0 %v145
    %v964 = vpop.f32.mrf.mxu0
    %v965 = vadd.f32 %v906, %v964
    %966 = vmatmul.f32.gmra.mxu0 %v155
    %v967 = vpop.f32.mrf.mxu0
    %v968 = vadd.f32 %v909, %v967
    %969 = vdwg.mxu0
    %970 = vmatpush.msra.mxu0 %v444
    %971 = vmatpush.msra.mxu0 %v442
    %972 = vmatpush.msra.mxu0 %v440
    %973 = vmatpush.msra.mxu0 %v438
    %974 = vmatpush.msra.mxu0 %v436
    %975 = vmatpush.msra.mxu0 %v434
    %976 = vmatpush.msra.mxu0 %v432
    %977 = vmatpush.msra.mxu0 %v430
    %978 = vmatpush.msra.mxu0 %v428
    %979 = vmatpush.msra.mxu0 %v426
    %980 = vmatpush.msra.mxu0 %v424
    %981 = vmatpush.msra.mxu0 %v422
    %982 = vmatpush.msra.mxu0 %v420
    %983 = vmatpush.msra.mxu0 %v418
    %984 = vmatpush.msra.mxu0 %v416
    %985 = vmatpush.msra.mxu0 %v414
    %986 = vmatmul.f32.gmra.mxu0 %v26
    %v987 = vpop.f32.mrf.mxu0
    %v988 = vadd.f32 %v929, %v987
    %989 = vmatmul.f32.gmra.mxu0 %v36
    %v990 = vpop.f32.mrf.mxu0
    %v991 = vadd.f32 %v932, %v990
    %992 = vmatmul.f32.gmra.mxu0 %v46
    %v993 = vpop.f32.mrf.mxu0
    %v994 = vadd.f32 %v935, %v993
    %995 = vmatmul.f32.gmra.mxu0 %v56
    %v996 = vpop.f32.mrf.mxu0
    %v997 = vadd.f32 %v938, %v996
    %998 = vmatmul.f32.gmra.mxu0 %v66
    %v999 = vpop.f32.mrf.mxu0
    %v1000 = vadd.f32 %v941, %v999
    %1001 = vmatmul.f32.gmra.mxu0 %v76
    %v1002 = vpop.f32.mrf.mxu0
    %v1003 = vadd.f32 %v944, %v1002
    %1004 = vmatmul.f32.gmra.mxu0 %v86
    %v1005 = vpop.f32.mrf.mxu0
    %v1006 = vadd.f32 %v947, %v1005
    %1007 = vmatmul.f32.gmra.mxu0 %v96
    %v1008 = vpop.f32.mrf.mxu0
    %v1009 = vadd.f32 %v950, %v1008
    %1010 = vmatmul.f32.gmra.mxu0 %v106
    %v1011 = vpop.f32.mrf.mxu0
    %v1012 = vadd.f32 %v953, %v1011
    %1013 = vmatmul.f32.gmra.mxu0 %v116
    %v1014 = vpop.f32.mrf.mxu0
    %v1015 = vadd.f32 %v956, %v1014
    %1016 = vmatmul.f32.gmra.mxu0 %v126
    %v1017 = vpop.f32.mrf.mxu0
    %v1018 = vadd.f32 %v959, %v1017
    %1019 = vmatmul.f32.gmra.mxu0 %v136
    %v1020 = vpop.f32.mrf.mxu0
    %v1021 = vadd.f32 %v962, %v1020
    %1022 = vmatmul.f32.gmra.mxu0 %v146
    %v1023 = vpop.f32.mrf.mxu0
    %v1024 = vadd.f32 %v965, %v1023
    %1025 = vmatmul.f32.gmra.mxu0 %v156
    %v1026 = vpop.f32.mrf.mxu0
    %v1027 = vadd.f32 %v968, %v1026
    %1028 = vdwg.mxu0
    %1029 = vmatpush.msra.mxu0 0.0
    %1030 = vmatpush.msra.mxu0 0.0
    %1031 = vmatpush.msra.mxu0 0.0
    %1032 = vmatpush.msra.mxu0 0.0
    %1033 = vmatpush.msra.mxu0 0.0
    %1034 = vmatpush.msra.mxu0 0.0
    %1035 = vmatpush.msra.mxu0 0.0
    %1036 = vmatpush.msra.mxu0 0.0
    %1037 = vmatpush.msra.mxu0 0.0
    %1038 = vmatpush.msra.mxu0 0.0
    %1039 = vmatpush.msra.mxu0 0.0
    %1040 = vmatpush.msra.mxu0 0.0
    %1041 = vmatpush.msra.mxu0 0.0
    %1042 = vmatpush.msra.mxu0 0.0
    %1043 = vmatpush.msra.mxu0 0.0
    %1044 = vmatpush.msra.mxu0 %v493
    %1045 = vmatmul.f32.gmra.mxu0 %v450
    %v1046 = vpop.f32.mrf.mxu0
    %v1047 = vadd.f32 %v988, %v1046
    %1048 = vmatmul.f32.gmra.mxu0 %v453
    %v1049 = vpop.f32.mrf.mxu0
    %v1050 = vadd.f32 %v991, %v1049
    %1051 = vmatmul.f32.gmra.mxu0 %v456
    %v1052 = vpop.f32.mrf.mxu0
    %v1053 = vadd.f32 %v994, %v1052
    %1054 = vmatmul.f32.gmra.mxu0 %v459
    %v1055 = vpop.f32.mrf.mxu0
    %v1056 = vadd.f32 %v997, %v1055
    %1057 = vmatmul.f32.gmra.mxu0 %v462
    %v1058 = vpop.f32.mrf.mxu0
    %v1059 = vadd.f32 %v1000, %v1058
    %1060 = vmatmul.f32.gmra.mxu0 %v465
    %v1061 = vpop.f32.mrf.mxu0
    %v1062 = vadd.f32 %v1003, %v1061
    %1063 = vmatmul.f32.gmra.mxu0 %v468
    %v1064 = vpop.f32.mrf.mxu0
    %v1065 = vadd.f32 %v1006, %v1064
    %1066 = vmatmul.f32.gmra.mxu0 %v471
    %v1067 = vpop.f32.mrf.mxu0
    %v1068 = vadd.f32 %v1009, %v1067
    %1069 = vmatmul.f32.gmra.mxu0 %v474
    %v1070 = vpop.f32.mrf.mxu0
    %v1071 = vadd.f32 %v1012, %v1070
    %1072 = vmatmul.f32.gmra.mxu0 %v477
    %v1073 = vpop.f32.mrf.mxu0
    %v1074 = vadd.f32 %v1015, %v1073
    %1075 = vmatmul.f32.gmra.mxu0 %v480
    %v1076 = vpop.f32.mrf.mxu0
    %v1077 = vadd.f32 %v1018, %v1076
    %1078 = vmatmul.f32.gmra.mxu0 %v483
    %v1079 = vpop.f32.mrf.mxu0
    %v1080 = vadd.f32 %v1021, %v1079
    %1081 = vmatmul.f32.gmra.mxu0 %v486
    %v1082 = vpop.f32.mrf.mxu0
    %v1083 = vadd.f32 %v1024, %v1082
    %1084 = vmatmul.f32.gmra.mxu0 %v489
    %v1085 = vpop.f32.mrf.mxu0
    %v1086 = vadd.f32 %v1027, %v1085
    %1087 = vdwg.mxu0
    %1088 = vmatpush.msra.mxu0 %v189
    %1089 = vmatpush.msra.mxu0 %v187
    %1090 = vmatpush.msra.mxu0 %v185
    %1091 = vmatpush.msra.mxu0 %v183
    %1092 = vmatpush.msra.mxu0 %v181
    %1093 = vmatpush.msra.mxu0 %v179
    %1094 = vmatpush.msra.mxu0 %v177
    %1095 = vmatpush.msra.mxu0 %v175
    %1096 = vmatpush.msra.mxu0 %v173
    %1097 = vmatpush.msra.mxu0 %v171
    %1098 = vmatpush.msra.mxu0 %v169
    %1099 = vmatpush.msra.mxu0 %v167
    %1100 = vmatpush.msra.mxu0 %v165
    %1101 = vmatpush.msra.mxu0 %v163
    %1102 = vmatpush.msra.mxu0 %v161
    %1103 = vmatpush.msra.mxu0 %v159
    %1104 = vmatmul.f32.gmra.mxu0 %v18
    %v1105 = vpop.f32.mrf.mxu0
    %v1106 = vadd.f32 0.0, %v1105
    %1107 = vmatmul.f32.gmra.mxu0 %v28
    %v1108 = vpop.f32.mrf.mxu0
    %v1109 = vadd.f32 0.0, %v1108
    %1110 = vmatmul.f32.gmra.mxu0 %v38
    %v1111 = vpop.f32.mrf.mxu0
    %v1112 = vadd.f32 0.0, %v1111
    %1113 = vmatmul.f32.gmra.mxu0 %v48
    %v1114 = vpop.f32.mrf.mxu0
    %v1115 = vadd.f32 0.0, %v1114
    %1116 = vmatmul.f32.gmra.mxu0 %v58
    %v1117 = vpop.f32.mrf.mxu0
    %v1118 = vadd.f32 0.0, %v1117
    %1119 = vmatmul.f32.gmra.mxu0 %v68
    %v1120 = vpop.f32.mrf.mxu0
    %v1121 = vadd.f32 0.0, %v1120
    %1122 = vmatmul.f32.gmra.mxu0 %v78
    %v1123 = vpop.f32.mrf.mxu0
    %v1124 = vadd.f32 0.0, %v1123
    %1125 = vmatmul.f32.gmra.mxu0 %v88
    %v1126 = vpop.f32.mrf.mxu0
    %v1127 = vadd.f32 0.0, %v1126
    %1128 = vmatmul.f32.gmra.mxu0 %v98
    %v1129 = vpop.f32.mrf.mxu0
    %v1130 = vadd.f32 0.0, %v1129
    %1131 = vmatmul.f32.gmra.mxu0 %v108
    %v1132 = vpop.f32.mrf.mxu0
    %v1133 = vadd.f32 0.0, %v1132
    %1134 = vmatmul.f32.gmra.mxu0 %v118
    %v1135 = vpop.f32.mrf.mxu0
    %v1136 = vadd.f32 0.0, %v1135
    %1137 = vmatmul.f32.gmra.mxu0 %v128
    %v1138 = vpop.f32.mrf.mxu0
    %v1139 = vadd.f32 0.0, %v1138
    %1140 = vmatmul.f32.gmra.mxu0 %v138
    %v1141 = vpop.f32.mrf.mxu0
    %v1142 = vadd.f32 0.0, %v1141
    %1143 = vmatmul.f32.gmra.mxu0 %v148
    %v1144 = vpop.f32.mrf.mxu0
    %v1145 = vadd.f32 0.0, %v1144
    %1146 = vdwg.mxu0
    %1147 = vmatpush.msra.mxu0 %v221
    %1148 = vmatpush.msra.mxu0 %v219
    %1149 = vmatpush.msra.mxu0 %v217
    %1150 = vmatpush.msra.mxu0 %v215
    %1151 = vmatpush.msra.mxu0 %v213
    %1152 = vmatpush.msra.mxu0 %v211
    %1153 = vmatpush.msra.mxu0 %v209
    %1154 = vmatpush.msra.mxu0 %v207
    %1155 = vmatpush.msra.mxu0 %v205
    %1156 = vmatpush.msra.mxu0 %v203
    %1157 = vmatpush.msra.mxu0 %v201
    %1158 = vmatpush.msra.mxu0 %v199
    %1159 = vmatpush.msra.mxu0 %v197
    %1160 = vmatpush.msra.mxu0 %v195
    %1161 = vmatpush.msra.mxu0 %v193
    %1162 = vmatpush.msra.mxu0 %v191
    %1163 = vmatmul.f32.gmra.mxu0 %v19
    %v1164 = vpop.f32.mrf.mxu0
    %v1165 = vadd.f32 %v1106, %v1164
    %1166 = vmatmul.f32.gmra.mxu0 %v29
    %v1167 = vpop.f32.mrf.mxu0
    %v1168 = vadd.f32 %v1109, %v1167
    %1169 = vmatmul.f32.gmra.mxu0 %v39
    %v1170 = vpop.f32.mrf.mxu0
    %v1171 = vadd.f32 %v1112, %v1170
    %1172 = vmatmul.f32.gmra.mxu0 %v49
    %v1173 = vpop.f32.mrf.mxu0
    %v1174 = vadd.f32 %v1115, %v1173
    %1175 = vmatmul.f32.gmra.mxu0 %v59
    %v1176 = vpop.f32.mrf.mxu0
    %v1177 = vadd.f32 %v1118, %v1176
    %1178 = vmatmul.f32.gmra.mxu0 %v69
    %v1179 = vpop.f32.mrf.mxu0
    %v1180 = vadd.f32 %v1121, %v1179
    %1181 = vmatmul.f32.gmra.mxu0 %v79
    %v1182 = vpop.f32.mrf.mxu0
    %v1183 = vadd.f32 %v1124, %v1182
    %1184 = vmatmul.f32.gmra.mxu0 %v89
    %v1185 = vpop.f32.mrf.mxu0
    %v1186 = vadd.f32 %v1127, %v1185
    %1187 = vmatmul.f32.gmra.mxu0 %v99
    %v1188 = vpop.f32.mrf.mxu0
    %v1189 = vadd.f32 %v1130, %v1188
    %1190 = vmatmul.f32.gmra.mxu0 %v109
    %v1191 = vpop.f32.mrf.mxu0
    %v1192 = vadd.f32 %v1133, %v1191
    %1193 = vmatmul.f32.gmra.mxu0 %v119
    %v1194 = vpop.f32.mrf.mxu0
    %v1195 = vadd.f32 %v1136, %v1194
    %1196 = vmatmul.f32.gmra.mxu0 %v129
    %v1197 = vpop.f32.mrf.mxu0
    %v1198 = vadd.f32 %v1139, %v1197
    %1199 = vmatmul.f32.gmra.mxu0 %v139
    %v1200 = vpop.f32.mrf.mxu0
    %v1201 = vadd.f32 %v1142, %v1200
    %1202 = vmatmul.f32.gmra.mxu0 %v149
    %v1203 = vpop.f32.mrf.mxu0
    %v1204 = vadd.f32 %v1145, %v1203
    %1205 = vdwg.mxu0
    %1206 = vmatpush.msra.mxu0 %v253
    %1207 = vmatpush.msra.mxu0 %v251
    %1208 = vmatpush.msra.mxu0 %v249
    %1209 = vmatpush.msra.mxu0 %v247
    %1210 = vmatpush.msra.mxu0 %v245
    %1211 = vmatpush.msra.mxu0 %v243
    %1212 = vmatpush.msra.mxu0 %v241
    %1213 = vmatpush.msra.mxu0 %v239
    %1214 = vmatpush.msra.mxu0 %v237
    %1215 = vmatpush.msra.mxu0 %v235
    %1216 = vmatpush.msra.mxu0 %v233
    %1217 = vmatpush.msra.mxu0 %v231
    %1218 = vmatpush.msra.mxu0 %v229
    %1219 = vmatpush.msra.mxu0 %v227
    %1220 = vmatpush.msra.mxu0 %v225
    %1221 = vmatpush.msra.mxu0 %v223
    %1222 = vmatmul.f32.gmra.mxu0 %v20
    %v1223 = vpop.f32.mrf.mxu0
    %v1224 = vadd.f32 %v1165, %v1223
    %1225 = vmatmul.f32.gmra.mxu0 %v30
    %v1226 = vpop.f32.mrf.mxu0
    %v1227 = vadd.f32 %v1168, %v1226
    %1228 = vmatmul.f32.gmra.mxu0 %v40
    %v1229 = vpop.f32.mrf.mxu0
    %v1230 = vadd.f32 %v1171, %v1229
    %1231 = vmatmul.f32.gmra.mxu0 %v50
    %v1232 = vpop.f32.mrf.mxu0
    %v1233 = vadd.f32 %v1174, %v1232
    %1234 = vmatmul.f32.gmra.mxu0 %v60
    %v1235 = vpop.f32.mrf.mxu0
    %v1236 = vadd.f32 %v1177, %v1235
    %1237 = vmatmul.f32.gmra.mxu0 %v70
    %v1238 = vpop.f32.mrf.mxu0
    %v1239 = vadd.f32 %v1180, %v1238
    %1240 = vmatmul.f32.gmra.mxu0 %v80
    %v1241 = vpop.f32.mrf.mxu0
    %v1242 = vadd.f32 %v1183, %v1241
    %1243 = vmatmul.f32.gmra.mxu0 %v90
    %v1244 = vpop.f32.mrf.mxu0
    %v1245 = vadd.f32 %v1186, %v1244
    %1246 = vmatmul.f32.gmra.mxu0 %v100
    %v1247 = vpop.f32.mrf.mxu0
    %v1248 = vadd.f32 %v1189, %v1247
    %1249 = vmatmul.f32.gmra.mxu0 %v110
    %v1250 = vpop.f32.mrf.mxu0
    %v1251 = vadd.f32 %v1192, %v1250
    %1252 = vmatmul.f32.gmra.mxu0 %v120
    %v1253 = vpop.f32.mrf.mxu0
    %v1254 = vadd.f32 %v1195, %v1253
    %1255 = vmatmul.f32.gmra.mxu0 %v130
    %v1256 = vpop.f32.mrf.mxu0
    %v1257 = vadd.f32 %v1198, %v1256
    %1258 = vmatmul.f32.gmra.mxu0 %v140
    %v1259 = vpop.f32.mrf.mxu0
    %v1260 = vadd.f32 %v1201, %v1259
    %1261 = vmatmul.f32.gmra.mxu0 %v150
    %v1262 = vpop.f32.mrf.mxu0
    %v1263 = vadd.f32 %v1204, %v1262
    %1264 = vdwg.mxu0
    %1265 = vmatpush.msra.mxu0 %v285
    %1266 = vmatpush.msra.mxu0 %v283
    %1267 = vmatpush.msra.mxu0 %v281
    %1268 = vmatpush.msra.mxu0 %v279
    %1269 = vmatpush.msra.mxu0 %v277
    %1270 = vmatpush.msra.mxu0 %v275
    %1271 = vmatpush.msra.mxu0 %v273
    %1272 = vmatpush.msra.mxu0 %v271
    %1273 = vmatpush.msra.mxu0 %v269
    %1274 = vmatpush.msra.mxu0 %v267
    %1275 = vmatpush.msra.mxu0 %v265
    %1276 = vmatpush.msra.mxu0 %v263
    %1277 = vmatpush.msra.mxu0 %v261
    %1278 = vmatpush.msra.mxu0 %v259
    %1279 = vmatpush.msra.mxu0 %v257
    %1280 = vmatpush.msra.mxu0 %v255
    %1281 = vmatmul.f32.gmra.mxu0 %v21
    %v1282 = vpop.f32.mrf.mxu0
    %v1283 = vadd.f32 %v1224, %v1282
    %1284 = vmatmul.f32.gmra.mxu0 %v31
    %v1285 = vpop.f32.mrf.mxu0
    %v1286 = vadd.f32 %v1227, %v1285
    %1287 = vmatmul.f32.gmra.mxu0 %v41
    %v1288 = vpop.f32.mrf.mxu0
    %v1289 = vadd.f32 %v1230, %v1288
    %1290 = vmatmul.f32.gmra.mxu0 %v51
    %v1291 = vpop.f32.mrf.mxu0
    %v1292 = vadd.f32 %v1233, %v1291
    %1293 = vmatmul.f32.gmra.mxu0 %v61
    %v1294 = vpop.f32.mrf.mxu0
    %v1295 = vadd.f32 %v1236, %v1294
    %1296 = vmatmul.f32.gmra.mxu0 %v71
    %v1297 = vpop.f32.mrf.mxu0
    %v1298 = vadd.f32 %v1239, %v1297
    %1299 = vmatmul.f32.gmra.mxu0 %v81
    %v1300 = vpop.f32.mrf.mxu0
    %v1301 = vadd.f32 %v1242, %v1300
    %1302 = vmatmul.f32.gmra.mxu0 %v91
    %v1303 = vpop.f32.mrf.mxu0
    %v1304 = vadd.f32 %v1245, %v1303
    %1305 = vmatmul.f32.gmra.mxu0 %v101
    %v1306 = vpop.f32.mrf.mxu0
    %v1307 = vadd.f32 %v1248, %v1306
    %1308 = vmatmul.f32.gmra.mxu0 %v111
    %v1309 = vpop.f32.mrf.mxu0
    %v1310 = vadd.f32 %v1251, %v1309
    %1311 = vmatmul.f32.gmra.mxu0 %v121
    %v1312 = vpop.f32.mrf.mxu0
    %v1313 = vadd.f32 %v1254, %v1312
    %1314 = vmatmul.f32.gmra.mxu0 %v131
    %v1315 = vpop.f32.mrf.mxu0
    %v1316 = vadd.f32 %v1257, %v1315
    %1317 = vmatmul.f32.gmra.mxu0 %v141
    %v1318 = vpop.f32.mrf.mxu0
    %v1319 = vadd.f32 %v1260, %v1318
    %1320 = vmatmul.f32.gmra.mxu0 %v151
    %v1321 = vpop.f32.mrf.mxu0
    %v1322 = vadd.f32 %v1263, %v1321
    %1323 = vdwg.mxu0
    %1324 = vmatpush.msra.mxu0 %v317
    %1325 = vmatpush.msra.mxu0 %v315
    %1326 = vmatpush.msra.mxu0 %v313
    %1327 = vmatpush.msra.mxu0 %v311
    %1328 = vmatpush.msra.mxu0 %v309
    %1329 = vmatpush.msra.mxu0 %v307
    %1330 = vmatpush.msra.mxu0 %v305
    %1331 = vmatpush.msra.mxu0 %v303
    %1332 = vmatpush.msra.mxu0 %v301
    %1333 = vmatpush.msra.mxu0 %v299
    %1334 = vmatpush.msra.mxu0 %v297
    %1335 = vmatpush.msra.mxu0 %v295
    %1336 = vmatpush.msra.mxu0 %v293
    %1337 = vmatpush.msra.mxu0 %v291
    %1338 = vmatpush.msra.mxu0 %v289
    %1339 = vmatpush.msra.mxu0 %v287
    %1340 = vmatmul.f32.gmra.mxu0 %v22
    %v1341 = vpop.f32.mrf.mxu0
    %v1342 = vadd.f32 %v1283, %v1341
    %1343 = vmatmul.f32.gmra.mxu0 %v32
    %v1344 = vpop.f32.mrf.mxu0
    %v1345 = vadd.f32 %v1286, %v1344
    %1346 = vmatmul.f32.gmra.mxu0 %v42
    %v1347 = vpop.f32.mrf.mxu0
    %v1348 = vadd.f32 %v1289, %v1347
    %1349 = vmatmul.f32.gmra.mxu0 %v52
    %v1350 = vpop.f32.mrf.mxu0
    %v1351 = vadd.f32 %v1292, %v1350
    %1352 = vmatmul.f32.gmra.mxu0 %v62
    %v1353 = vpop.f32.mrf.mxu0
    %v1354 = vadd.f32 %v1295, %v1353
    %1355 = vmatmul.f32.gmra.mxu0 %v72
    %v1356 = vpop.f32.mrf.mxu0
    %v1357 = vadd.f32 %v1298, %v1356
    %1358 = vmatmul.f32.gmra.mxu0 %v82
    %v1359 = vpop.f32.mrf.mxu0
    %v1360 = vadd.f32 %v1301, %v1359
    %1361 = vmatmul.f32.gmra.mxu0 %v92
    %v1362 = vpop.f32.mrf.mxu0
    %v1363 = vadd.f32 %v1304, %v1362
    %1364 = vmatmul.f32.gmra.mxu0 %v102
    %v1365 = vpop.f32.mrf.mxu0
    %v1366 = vadd.f32 %v1307, %v1365
    %1367 = vmatmul.f32.gmra.mxu0 %v112
    %v1368 = vpop.f32.mrf.mxu0
    %v1369 = vadd.f32 %v1310, %v1368
    %1370 = vmatmul.f32.gmra.mxu0 %v122
    %v1371 = vpop.f32.mrf.mxu0
    %v1372 = vadd.f32 %v1313, %v1371
    %1373 = vmatmul.f32.gmra.mxu0 %v132
    %v1374 = vpop.f32.mrf.mxu0
    %v1375 = vadd.f32 %v1316, %v1374
    %1376 = vmatmul.f32.gmra.mxu0 %v142
    %v1377 = vpop.f32.mrf.mxu0
    %v1378 = vadd.f32 %v1319, %v1377
    %1379 = vmatmul.f32.gmra.mxu0 %v152
    %v1380 = vpop.f32.mrf.mxu0
    %v1381 = vadd.f32 %v1322, %v1380
    %1382 = vdwg.mxu0
    %1383 = vmatpush.msra.mxu0 %v349
    %1384 = vmatpush.msra.mxu0 %v347
    %1385 = vmatpush.msra.mxu0 %v345
    %1386 = vmatpush.msra.mxu0 %v343
    %1387 = vmatpush.msra.mxu0 %v341
    %1388 = vmatpush.msra.mxu0 %v339
    %1389 = vmatpush.msra.mxu0 %v337
    %1390 = vmatpush.msra.mxu0 %v335
    %1391 = vmatpush.msra.mxu0 %v333
    %1392 = vmatpush.msra.mxu0 %v331
    %1393 = vmatpush.msra.mxu0 %v329
    %1394 = vmatpush.msra.mxu0 %v327
    %1395 = vmatpush.msra.mxu0 %v325
    %1396 = vmatpush.msra.mxu0 %v323
    %1397 = vmatpush.msra.mxu0 %v321
    %1398 = vmatpush.msra.mxu0 %v319
    %1399 = vmatmul.f32.gmra.mxu0 %v23
    %v1400 = vpop.f32.mrf.mxu0
    %v1401 = vadd.f32 %v1342, %v1400
    %1402 = vmatmul.f32.gmra.mxu0 %v33
    %v1403 = vpop.f32.mrf.mxu0
    %v1404 = vadd.f32 %v1345, %v1403
    %1405 = vmatmul.f32.gmra.mxu0 %v43
    %v1406 = vpop.f32.mrf.mxu0
    %v1407 = vadd.f32 %v1348, %v1406
    %1408 = vmatmul.f32.gmra.mxu0 %v53
    %v1409 = vpop.f32.mrf.mxu0
    %v1410 = vadd.f32 %v1351, %v1409
    %1411 = vmatmul.f32.gmra.mxu0 %v63
    %v1412 = vpop.f32.mrf.mxu0
    %v1413 = vadd.f32 %v1354, %v1412
    %1414 = vmatmul.f32.gmra.mxu0 %v73
    %v1415 = vpop.f32.mrf.mxu0
    %v1416 = vadd.f32 %v1357, %v1415
    %1417 = vmatmul.f32.gmra.mxu0 %v83
    %v1418 = vpop.f32.mrf.mxu0
    %v1419 = vadd.f32 %v1360, %v1418
    %1420 = vmatmul.f32.gmra.mxu0 %v93
    %v1421 = vpop.f32.mrf.mxu0
    %v1422 = vadd.f32 %v1363, %v1421
    %1423 = vmatmul.f32.gmra.mxu0 %v103
    %v1424 = vpop.f32.mrf.mxu0
    %v1425 = vadd.f32 %v1366, %v1424
    %1426 = vmatmul.f32.gmra.mxu0 %v113
    %v1427 = vpop.f32.mrf.mxu0
    %v1428 = vadd.f32 %v1369, %v1427
    %1429 = vmatmul.f32.gmra.mxu0 %v123
    %v1430 = vpop.f32.mrf.mxu0
    %v1431 = vadd.f32 %v1372, %v1430
    %1432 = vmatmul.f32.gmra.mxu0 %v133
    %v1433 = vpop.f32.mrf.mxu0
    %v1434 = vadd.f32 %v1375, %v1433
    %1435 = vmatmul.f32.gmra.mxu0 %v143
    %v1436 = vpop.f32.mrf.mxu0
    %v1437 = vadd.f32 %v1378, %v1436
    %1438 = vmatmul.f32.gmra.mxu0 %v153
    %v1439 = vpop.f32.mrf.mxu0
    %v1440 = vadd.f32 %v1381, %v1439
    %1441 = vdwg.mxu0
    %1442 = vmatpush.msra.mxu0 %v381
    %1443 = vmatpush.msra.mxu0 %v379
    %1444 = vmatpush.msra.mxu0 %v377
    %1445 = vmatpush.msra.mxu0 %v375
    %1446 = vmatpush.msra.mxu0 %v373
    %1447 = vmatpush.msra.mxu0 %v371
    %1448 = vmatpush.msra.mxu0 %v369
    %1449 = vmatpush.msra.mxu0 %v367
    %1450 = vmatpush.msra.mxu0 %v365
    %1451 = vmatpush.msra.mxu0 %v363
    %1452 = vmatpush.msra.mxu0 %v361
    %1453 = vmatpush.msra.mxu0 %v359
    %1454 = vmatpush.msra.mxu0 %v357
    %1455 = vmatpush.msra.mxu0 %v355
    %1456 = vmatpush.msra.mxu0 %v353
    %1457 = vmatpush.msra.mxu0 %v351
    %1458 = vmatmul.f32.gmra.mxu0 %v24
    %v1459 = vpop.f32.mrf.mxu0
    %v1460 = vadd.f32 %v1401, %v1459
    %1461 = vmatmul.f32.gmra.mxu0 %v34
    %v1462 = vpop.f32.mrf.mxu0
    %v1463 = vadd.f32 %v1404, %v1462
    %1464 = vmatmul.f32.gmra.mxu0 %v44
    %v1465 = vpop.f32.mrf.mxu0
    %v1466 = vadd.f32 %v1407, %v1465
    %1467 = vmatmul.f32.gmra.mxu0 %v54
    %v1468 = vpop.f32.mrf.mxu0
    %v1469 = vadd.f32 %v1410, %v1468
    %1470 = vmatmul.f32.gmra.mxu0 %v64
    %v1471 = vpop.f32.mrf.mxu0
    %v1472 = vadd.f32 %v1413, %v1471
    %1473 = vmatmul.f32.gmra.mxu0 %v74
    %v1474 = vpop.f32.mrf.mxu0
    %v1475 = vadd.f32 %v1416, %v1474
    %1476 = vmatmul.f32.gmra.mxu0 %v84
    %v1477 = vpop.f32.mrf.mxu0
    %v1478 = vadd.f32 %v1419, %v1477
    %1479 = vmatmul.f32.gmra.mxu0 %v94
    %v1480 = vpop.f32.mrf.mxu0
    %v1481 = vadd.f32 %v1422, %v1480
    %1482 = vmatmul.f32.gmra.mxu0 %v104
    %v1483 = vpop.f32.mrf.mxu0
    %v1484 = vadd.f32 %v1425, %v1483
    %1485 = vmatmul.f32.gmra.mxu0 %v114
    %v1486 = vpop.f32.mrf.mxu0
    %v1487 = vadd.f32 %v1428, %v1486
    %1488 = vmatmul.f32.gmra.mxu0 %v124
    %v1489 = vpop.f32.mrf.mxu0
    %v1490 = vadd.f32 %v1431, %v1489
    %1491 = vmatmul.f32.gmra.mxu0 %v134
    %v1492 = vpop.f32.mrf.mxu0
    %v1493 = vadd.f32 %v1434, %v1492
    %1494 = vmatmul.f32.gmra.mxu0 %v144
    %v1495 = vpop.f32.mrf.mxu0
    %v1496 = vadd.f32 %v1437, %v1495
    %1497 = vmatmul.f32.gmra.mxu0 %v154
    %v1498 = vpop.f32.mrf.mxu0
    %v1499 = vadd.f32 %v1440, %v1498
    %1500 = vdwg.mxu0
    %1501 = vmatpush.msra.mxu0 %v413
    %1502 = vmatpush.msra.mxu0 %v411
    %1503 = vmatpush.msra.mxu0 %v409
    %1504 = vmatpush.msra.mxu0 %v407
    %1505 = vmatpush.msra.mxu0 %v405
    %1506 = vmatpush.msra.mxu0 %v403
    %1507 = vmatpush.msra.mxu0 %v401
    %1508 = vmatpush.msra.mxu0 %v399
    %1509 = vmatpush.msra.mxu0 %v397
    %1510 = vmatpush.msra.mxu0 %v395
    %1511 = vmatpush.msra.mxu0 %v393
    %1512 = vmatpush.msra.mxu0 %v391
    %1513 = vmatpush.msra.mxu0 %v389
    %1514 = vmatpush.msra.mxu0 %v387
    %1515 = vmatpush.msra.mxu0 %v385
    %1516 = vmatpush.msra.mxu0 %v383
    %1517 = vmatmul.f32.gmra.mxu0 %v25
    %v1518 = vpop.f32.mrf.mxu0
    %v1519 = vadd.f32 %v1460, %v1518
    %1520 = vmatmul.f32.gmra.mxu0 %v35
    %v1521 = vpop.f32.mrf.mxu0
    %v1522 = vadd.f32 %v1463, %v1521
    %1523 = vmatmul.f32.gmra.mxu0 %v45
    %v1524 = vpop.f32.mrf.mxu0
    %v1525 = vadd.f32 %v1466, %v1524
    %1526 = vmatmul.f32.gmra.mxu0 %v55
    %v1527 = vpop.f32.mrf.mxu0
    %v1528 = vadd.f32 %v1469, %v1527
    %1529 = vmatmul.f32.gmra.mxu0 %v65
    %v1530 = vpop.f32.mrf.mxu0
    %v1531 = vadd.f32 %v1472, %v1530
    %1532 = vmatmul.f32.gmra.mxu0 %v75
    %v1533 = vpop.f32.mrf.mxu0
    %v1534 = vadd.f32 %v1475, %v1533
    %1535 = vmatmul.f32.gmra.mxu0 %v85
    %v1536 = vpop.f32.mrf.mxu0
    %v1537 = vadd.f32 %v1478, %v1536
    %1538 = vmatmul.f32.gmra.mxu0 %v95
    %v1539 = vpop.f32.mrf.mxu0
    %v1540 = vadd.f32 %v1481, %v1539
    %1541 = vmatmul.f32.gmra.mxu0 %v105
    %v1542 = vpop.f32.mrf.mxu0
    %v1543 = vadd.f32 %v1484, %v1542
    %1544 = vmatmul.f32.gmra.mxu0 %v115
    %v1545 = vpop.f32.mrf.mxu0
    %v1546 = vadd.f32 %v1487, %v1545
    %1547 = vmatmul.f32.gmra.mxu0 %v125
    %v1548 = vpop.f32.mrf.mxu0
    %v1549 = vadd.f32 %v1490, %v1548
    %1550 = vmatmul.f32.gmra.mxu0 %v135
    %v1551 = vpop.f32.mrf.mxu0
    %v1552 = vadd.f32 %v1493, %v1551
    %1553 = vmatmul.f32.gmra.mxu0 %v145
    %v1554 = vpop.f32.mrf.mxu0
    %v1555 = vadd.f32 %v1496, %v1554
    %1556 = vmatmul.f32.gmra.mxu0 %v155
    %v1557 = vpop.f32.mrf.mxu0
    %v1558 = vadd.f32 %v1499, %v1557
    %1559 = vdwg.mxu0
    %1560 = vmatpush.msra.mxu0 %v445
    %1561 = vmatpush.msra.mxu0 %v443
    %1562 = vmatpush.msra.mxu0 %v441
    %1563 = vmatpush.msra.mxu0 %v439
    %1564 = vmatpush.msra.mxu0 %v437
    %1565 = vmatpush.msra.mxu0 %v435
    %1566 = vmatpush.msra.mxu0 %v433
    %1567 = vmatpush.msra.mxu0 %v431
    %1568 = vmatpush.msra.mxu0 %v429
    %1569 = vmatpush.msra.mxu0 %v427
    %1570 = vmatpush.msra.mxu0 %v425
    %1571 = vmatpush.msra.mxu0 %v423
    %1572 = vmatpush.msra.mxu0 %v421
    %1573 = vmatpush.msra.mxu0 %v419
    %1574 = vmatpush.msra.mxu0 %v417
    %1575 = vmatpush.msra.mxu0 %v415
    %1576 = vmatmul.f32.gmra.mxu0 %v26
    %v1577 = vpop.f32.mrf.mxu0
    %v1578 = vadd.f32 %v1519, %v1577
    %1579 = vmatmul.f32.gmra.mxu0 %v36
    %v1580 = vpop.f32.mrf.mxu0
    %v1581 = vadd.f32 %v1522, %v1580
    %1582 = vmatmul.f32.gmra.mxu0 %v46
    %v1583 = vpop.f32.mrf.mxu0
    %v1584 = vadd.f32 %v1525, %v1583
    %1585 = vmatmul.f32.gmra.mxu0 %v56
    %v1586 = vpop.f32.mrf.mxu0
    %v1587 = vadd.f32 %v1528, %v1586
    %1588 = vmatmul.f32.gmra.mxu0 %v66
    %v1589 = vpop.f32.mrf.mxu0
    %v1590 = vadd.f32 %v1531, %v1589
    %1591 = vmatmul.f32.gmra.mxu0 %v76
    %v1592 = vpop.f32.mrf.mxu0
    %v1593 = vadd.f32 %v1534, %v1592
    %1594 = vmatmul.f32.gmra.mxu0 %v86
    %v1595 = vpop.f32.mrf.mxu0
    %v1596 = vadd.f32 %v1537, %v1595
    %1597 = vmatmul.f32.gmra.mxu0 %v96
    %v1598 = vpop.f32.mrf.mxu0
    %v1599 = vadd.f32 %v1540, %v1598
    %1600 = vmatmul.f32.gmra.mxu0 %v106
    %v1601 = vpop.f32.mrf.mxu0
    %v1602 = vadd.f32 %v1543, %v1601
    %1603 = vmatmul.f32.gmra.mxu0 %v116
    %v1604 = vpop.f32.mrf.mxu0
    %v1605 = vadd.f32 %v1546, %v1604
    %1606 = vmatmul.f32.gmra.mxu0 %v126
    %v1607 = vpop.f32.mrf.mxu0
    %v1608 = vadd.f32 %v1549, %v1607
    %1609 = vmatmul.f32.gmra.mxu0 %v136
    %v1610 = vpop.f32.mrf.mxu0
    %v1611 = vadd.f32 %v1552, %v1610
    %1612 = vmatmul.f32.gmra.mxu0 %v146
    %v1613 = vpop.f32.mrf.mxu0
    %v1614 = vadd.f32 %v1555, %v1613
    %1615 = vmatmul.f32.gmra.mxu0 %v156
    %v1616 = vpop.f32.mrf.mxu0
    %v1617 = vadd.f32 %v1558, %v1616
    %1618 = vdwg.mxu0
    %1619 = vmatpush.msra.mxu0 0.0
    %1620 = vmatpush.msra.mxu0 0.0
    %1621 = vmatpush.msra.mxu0 0.0
    %1622 = vmatpush.msra.mxu0 0.0
    %1623 = vmatpush.msra.mxu0 0.0
    %1624 = vmatpush.msra.mxu0 0.0
    %1625 = vmatpush.msra.mxu0 0.0
    %1626 = vmatpush.msra.mxu0 0.0
    %1627 = vmatpush.msra.mxu0 0.0
    %1628 = vmatpush.msra.mxu0 0.0
    %1629 = vmatpush.msra.mxu0 0.0
    %1630 = vmatpush.msra.mxu0 0.0
    %1631 = vmatpush.msra.mxu0 0.0
    %1632 = vmatpush.msra.mxu0 0.0
    %1633 = vmatpush.msra.mxu0 0.0
    %1634 = vmatpush.msra.mxu0 %v496
    %1635 = vmatmul.f32.gmra.mxu0 %v450
    %v1636 = vpop.f32.mrf.mxu0
    %v1637 = vadd.f32 %v1578, %v1636
    %1638 = vmatmul.f32.gmra.mxu0 %v453
    %v1639 = vpop.f32.mrf.mxu0
    %v1640 = vadd.f32 %v1581, %v1639
    %1641 = vmatmul.f32.gmra.mxu0 %v456
    %v1642 = vpop.f32.mrf.mxu0
    %v1643 = vadd.f32 %v1584, %v1642
    %1644 = vmatmul.f32.gmra.mxu0 %v459
    %v1645 = vpop.f32.mrf.mxu0
    %v1646 = vadd.f32 %v1587, %v1645
    %1647 = vmatmul.f32.gmra.mxu0 %v462
    %v1648 = vpop.f32.mrf.mxu0
    %v1649 = vadd.f32 %v1590, %v1648
    %1650 = vmatmul.f32.gmra.mxu0 %v465
    %v1651 = vpop.f32.mrf.mxu0
    %v1652 = vadd.f32 %v1593, %v1651
    %1653 = vmatmul.f32.gmra.mxu0 %v468
    %v1654 = vpop.f32.mrf.mxu0
    %v1655 = vadd.f32 %v1596, %v1654
    %1656 = vmatmul.f32.gmra.mxu0 %v471
    %v1657 = vpop.f32.mrf.mxu0
    %v1658 = vadd.f32 %v1599, %v1657
    %1659 = vmatmul.f32.gmra.mxu0 %v474
    %v1660 = vpop.f32.mrf.mxu0
    %v1661 = vadd.f32 %v1602, %v1660
    %1662 = vmatmul.f32.gmra.mxu0 %v477
    %v1663 = vpop.f32.mrf.mxu0
    %v1664 = vadd.f32 %v1605, %v1663
    %1665 = vmatmul.f32.gmra.mxu0 %v480
    %v1666 = vpop.f32.mrf.mxu0
    %v1667 = vadd.f32 %v1608, %v1666
    %1668 = vmatmul.f32.gmra.mxu0 %v483
    %v1669 = vpop.f32.mrf.mxu0
    %v1670 = vadd.f32 %v1611, %v1669
    %1671 = vmatmul.f32.gmra.mxu0 %v486
    %v1672 = vpop.f32.mrf.mxu0
    %v1673 = vadd.f32 %v1614, %v1672
    %1674 = vmatmul.f32.gmra.mxu0 %v489
    %v1675 = vpop.f32.mrf.mxu0
    %v1676 = vadd.f32 %v1617, %v1675
    %1677 = vdwg.mxu0
    %v1678 = vmax.f32 %v1047, %v1053
    %v1679 = vmax.f32 %v1050, %v1056
    %v1680 = vmax.f32 %v1678, %v1059
    %v1681 = vmax.f32 %v1679, %v1062
    %v1682 = vmax.f32 %v1680, %v1065
    %v1683 = vmax.f32 %v1682, %v1681
    %v1684 = vrot.slane %v1683, 4
    %v1685 = vmax.f32 %v1683, %v1684
    %v1686 = vrot.slane %v1685, 2
    %v1687 = vmax.f32 %v1685, %v1686
    %v1688 = vrot.slane %v1687, 1
    %v1689 = vmax.f32 %v1687, %v1688
    %vm1690 = vcmask 261120
    %v1691 = vsel %vm1690, %v1637, -inf
    %v1692 = vsel %vm1690, %v1640, -inf
    %v1693 = vsel %vm1690, %v1643, -inf
    %v1694 = vmax.f32 %v1691, %v1693
    %v1695 = vsel %vm1690, %v1646, -inf
    %v1696 = vmax.f32 %v1692, %v1695
    %v1697 = vsel %vm1690, %v1649, -inf
    %v1698 = vmax.f32 %v1694, %v1697
    %v1699 = vsel %vm1690, %v1652, -inf
    %v1700 = vmax.f32 %v1696, %v1699
    %v1701 = vsel %vm1690, %v1655, -inf
    %v1702 = vmax.f32 %v1698, %v1701
    %v1703 = vmax.f32 %v1702, %v1700
    %v1704 = vrot.slane %v1703, 4
    %v1705 = vmax.f32 %v1703, %v1704
    %v1706 = vrot.slane %v1705, 2
    %v1707 = vmax.f32 %v1705, %v1706
    %v1708 = vrot.slane %v1707, 1
    %v1709 = vmax.f32 %v1707, %v1708
    %v1710 = vmax.f32 %v1068, %v1074
    %v1711 = vmax.f32 %v1071, %v1077
    %v1712 = vmax.f32 %v1710, %v1080
    %v1713 = vmax.f32 %v1711, %v1083
    %v1714 = vmax.f32 %v1712, %v1086
    %v1715 = vmax.f32 %v1714, %v1713
    %v1716 = vrot.slane %v1715, 4
    %v1717 = vmax.f32 %v1715, %v1716
    %v1718 = vrot.slane %v1717, 2
    %v1719 = vmax.f32 %v1717, %v1718
    %v1720 = vrot.slane %v1719, 1
    %v1721 = vmax.f32 %v1719, %v1720
    %v1722 = vsel %vm1690, %v1658, -inf
    %v1723 = vsel %vm1690, %v1661, -inf
    %v1724 = vsel %vm1690, %v1664, -inf
    %v1725 = vmax.f32 %v1722, %v1724
    %v1726 = vsel %vm1690, %v1667, -inf
    %v1727 = vmax.f32 %v1723, %v1726
    %v1728 = vsel %vm1690, %v1670, -inf
    %v1729 = vmax.f32 %v1725, %v1728
    %v1730 = vsel %vm1690, %v1673, -inf
    %v1731 = vmax.f32 %v1727, %v1730
    %v1732 = vsel %vm1690, %v1676, -inf
    %v1733 = vmax.f32 %v1729, %v1732
    %v1734 = vmax.f32 %v1733, %v1731
    %v1735 = vrot.slane %v1734, 4
    %v1736 = vmax.f32 %v1734, %v1735
    %v1737 = vrot.slane %v1736, 2
    %v1738 = vmax.f32 %v1736, %v1737
    %v1739 = vrot.slane %v1738, 1
    %v1740 = vmax.f32 %v1738, %v1739
    %vm1741 = vcmask 1040384
    %v1742 = vsel %vm1741, %v1689, %v1721
    %v1743 = vsel %vm1741, %v1709, %v1740
    %v1744 = vld [vmem:[%s2] sm:$0x3]
    %v1746 = vperm.slane %v1744, 0
    %v1747 = vperm.slane %v1744, 1
    %v1750 = vadd.f32 %v1742, %v1746
    %v1751 = vadd.f32 %v1743, %v1747
    %v1752 = vmax.f32 %v1750, 0.0
    %v1753 = vmax.f32 %v1751, 0.0
    %v1754 = vld [vmem:[%s3] sm:$0xff]
    %v1755 = vld [vmem:[%s3 + $0x8] sm:$0xff]
    %v1756 = vld [vmem:[%s3 + $0x10] sm:$0xff]
    %v1757 = vld [vmem:[%s3 + $0x18] sm:$0xff]
    %v1758 = vld [vmem:[%s3 + $0x20] sm:$0xff]
    %v1759 = vld [vmem:[%s3 + $0x28] sm:$0xff]
    %v1760 = vld [vmem:[%s3 + $0x30] sm:$0xff]
    %v1761 = vld [vmem:[%s3 + $0x38] sm:$0xff]
    %v1762 = vld [vmem:[%s3 + $0x40] sm:$0xff]
    %v1763 = vld [vmem:[%s3 + $0x48] sm:$0xff]
    %v1764 = vld [vmem:[%s3 + $0x50] sm:$0xff]
    %v1765 = vld [vmem:[%s3 + $0x58] sm:$0xff]
    %v1766 = vld [vmem:[%s3 + $0x60] sm:$0xff]
    %v1767 = vld [vmem:[%s3 + $0x68] sm:$0xff]
    %v1768 = vld [vmem:[%s3 + $0x70] sm:$0xff]
    %v1769 = vld [vmem:[%s3 + $0x78] sm:$0xff]
    %v1770 = vld [vmem:[%s3 + $0x80] sm:$0xff]
    %v1771 = vld [vmem:[%s3 + $0x88] sm:$0xff]
    %v1772 = vld [vmem:[%s3 + $0x90] sm:$0xff]
    %v1773 = vld [vmem:[%s3 + $0x98] sm:$0xff]
    %v1775 = vsel %vm1690, %v1753, 0
    %1777 = vmatpush.msra.mxu0 %v1769
    %1778 = vmatpush.msra.mxu0 %v1768
    %1779 = vmatpush.msra.mxu0 %v1767
    %1780 = vmatpush.msra.mxu0 %v1766
    %1781 = vmatpush.msra.mxu0 %v1765
    %1782 = vmatpush.msra.mxu0 %v1764
    %1783 = vmatpush.msra.mxu0 %v1763
    %1784 = vmatpush.msra.mxu0 %v1762
    %1785 = vmatpush.msra.mxu0 %v1761
    %1786 = vmatpush.msra.mxu0 %v1760
    %1787 = vmatpush.msra.mxu0 %v1759
    %1788 = vmatpush.msra.mxu0 %v1758
    %1789 = vmatpush.msra.mxu0 %v1757
    %1790 = vmatpush.msra.mxu0 %v1756
    %1791 = vmatpush.msra.mxu0 %v1755
    %1792 = vmatpush.msra.mxu0 %v1754
    %1793 = vmatmul.f32.gmra.mxu0 %v1752
    %v1794 = vpop.f32.mrf.mxu0
    %v1795 = vadd.f32 0.0, %v1794
    %1796 = vdwg.mxu0
    %1797 = vmatpush.msra.mxu0 0.0
    %1798 = vmatpush.msra.mxu0 0.0
    %1799 = vmatpush.msra.mxu0 0.0
    %1800 = vmatpush.msra.mxu0 0.0
    %1801 = vmatpush.msra.mxu0 0.0
    %1802 = vmatpush.msra.mxu0 0.0
    %1803 = vmatpush.msra.mxu0 0.0
    %1804 = vmatpush.msra.mxu0 0.0
    %1805 = vmatpush.msra.mxu0 0.0
    %1806 = vmatpush.msra.mxu0 0.0
    %1807 = vmatpush.msra.mxu0 0.0
    %1808 = vmatpush.msra.mxu0 0.0
    %1809 = vmatpush.msra.mxu0 %v1773
    %1810 = vmatpush.msra.mxu0 %v1772
    %1811 = vmatpush.msra.mxu0 %v1771
    %1812 = vmatpush.msra.mxu0 %v1770
    %1813 = vmatmul.f32.gmra.mxu0 %v1775
    %v1814 = vpop.f32.mrf.mxu0
    %v1815 = vadd.f32 %v1795, %v1814
    %1816 = vdwg.mxu0
    %vm1817 = vcmask 74752
    %1818 = vst.msk [vmem:[#allocation2] sm:$0x3] %vm1817, %v1815
    // Predicated region
    $region18: #{boris_conv_net.1} parent=1 // pred_check
      _
    $region19: #{boris_conv_net.1} parent=1 // pred_check_branch
      %1820 = sbr.rel (0) target = $region21
    $region20: #{boris_conv_net.1} parent=1 // pred_region
      %1822 = vsyncadd [#allocation3], 0
      %s1824 = sshll.u32 [#allocation2], 4
      %s1825 = int_to_ptr.vmem [resolvable:$true] %s1824
      %s1826 = sshll.u32 %s4, 4
      %s1827 = int_to_ptr.hbm [resolvable:$true] %s1826
      %1829 = dma.vmem_to_hbm [thread:$0]  %s1825, 32, %s1827, [#allocation3]
    $region21: #{boris_conv_net.1} parent=1 // pred_fallthru
      _
    // Predicated region
    $region22: #{boris_conv_net.1} parent=1 // pred_check
      _
    $region23: #{boris_conv_net.1} parent=1 // pred_check_branch
      %1831 = sbr.rel (0) target = $region25
    $region24: #{boris_conv_net.1} parent=1 // pred_region
      %1833 = dma.done [#allocation3], 32
    $region25: #{boris_conv_net.1} parent=1 // pred_fallthru
      _
    %1834 = vsyncpa [#allocation3], 1

</llo_original>
